<compile_context>
chip_gen: v7x
topology: tpu7x:2x2x1
jax: 0.10.0
libtpu: 0.0.40
codegen_flags: <defaults>
</compile_context>

<pallas_src>
import numpy as np
import jax
import jax.numpy as jnp
from jax.experimental import pallas as pl
from jax.experimental.pallas import tpu as pltpu

_LN_EPS = 1e-5


# ----------------------------------------------------------------------------
# Fused Pallas kernel: one grid step == one batch BLOCK, whole PSA forward.
# ----------------------------------------------------------------------------
def _psa_kernel(x_ref, wchan_ref, wsq_ref, wsvt_ref, slab_ref, o_ref):
    # Packed row parameters (one DMA'd slab instead of 8 tiny inputs).
    slab = slab_ref[...]                     # (8, C) fp32
    wq_row  = slab[0:1, :]                   # ch_wq weight as a row     (1, C)
    b_chan  = slab[1:2, :]                   # bv @ Wz + bz (folded)     (1, C)
    ln_g    = slab[2:3, :]                   # LayerNorm gamma           (1, C)
    ln_b    = slab[3:4, :]                   # LayerNorm beta            (1, C)
    bsq_row = slab[4:5, :]                   # sp_wq bias, zero-padded   (1, C)
    bsv_row = slab[5:6, :]                   # sp_wv bias, zero-padded   (1, C)

    w_chan = wchan_ref[...]                  # (C, C)  == Wv @ Wz (pre-folded)
    w_sq   = wsq_ref[...]                    # (C, C)  sp_wq weight, cols padded
    w_svt  = wsvt_ref[...]                   # (C, C)  sp_wv weight^T, rows padded

    # Static unroll over the batch elements of this block (bb is tiny).
    for b in range(x_ref.shape[0]):
        x = x_ref[b]                                                   # (HW, C)

        # ---------------- channel-only polarized attention ----------------
        # softmax_HW(x @ wq); ch_wq bias omitted (softmax is shift-invariant).
        cq = jnp.sum(x * wq_row, axis=-1, keepdims=True)               # (HW, 1)
        m = jnp.max(cq, axis=0, keepdims=True)                         # (1, 1)
        e = jnp.exp(cq - m)                                            # (HW, 1)  EUP
        s = jnp.sum(e, axis=0, keepdims=True)                          # (1, 1)
        # xnorm = sum_i softmax_i * x_i  (normalize once with a scalar divide)
        xnorm = jnp.sum(x * e, axis=0, keepdims=True) / s              # (1, C)
        # cw = xnorm @ (Wv @ Wz) + (bv @ Wz + bz)   -- rank-1 collapsed branch
        cw = jnp.dot(xnorm, w_chan,
                     preferred_element_type=jnp.float32) + b_chan      # (1, C)
        # LayerNorm over C (biased variance, eps=1e-5) + sigmoid
        mu = jnp.mean(cw, axis=-1, keepdims=True)
        var = jnp.mean(jnp.square(cw - mu), axis=-1, keepdims=True)
        ln = (cw - mu) * jax.lax.rsqrt(var + _LN_EPS) * ln_g + ln_b
        channel_weight = jax.nn.sigmoid(ln)                            # (1, C)
        channel_out = x * channel_weight                               # (HW, C)

        # ---------------- spatial-only polarized attention ----------------
        # agp(sp_wq(channel_out)) == sp_wq(mean(channel_out)): exact — the 1x1
        # conv is affine with no activation.
        co_mean = jnp.mean(channel_out, axis=0, keepdims=True)         # (1, C)
        sq = jnp.dot(co_mean, w_sq,
                     preferred_element_type=jnp.float32) + bsq_row     # (1, C) (upper lanes 0)
        # sz_i = <co_i, Wsv^T sq> + <bsv, sq>     -- rank-1 collapsed branch
        w_eff = jnp.dot(sq, w_svt, preferred_element_type=jnp.float32) # (1, C)
        c0 = jnp.sum(sq * bsv_row, axis=-1, keepdims=True)             # (1, 1)
        sz = jnp.sum(channel_out * w_eff, axis=-1, keepdims=True) + c0 # (HW, 1)
        spatial_weight = jax.nn.sigmoid(sz)                            # (HW, 1)

        # out = spatial_out + channel_out = channel_out * (1 + spatial_weight)
        o_ref[b] = (channel_out * (1.0 + spatial_weight)).astype(o_ref.dtype)


def psa_forward_nhwc(x_nhwc, kp, *, batch_block=None):
    """x_nhwc: (B, H, W, C) fp32.  kp: pre-folded kernel params.

    batch_block=None  -> whole batch in one grid step (best on single-TC v5e/v6e).
    batch_block=1     -> per-batch grid steps; with dimension_semantics=("parallel",)
                         the batch axis can shard across v7x's two TensorCores.
    """
    B, H, W, C = x_nhwc.shape
    HW = H * W
    bb = B if batch_block is None else batch_block
    assert B % bb == 0
    x2 = x_nhwc.reshape(B, HW, C)

    full = lambda shape: pl.BlockSpec(shape, lambda i: (0,) * len(shape))

    out = pl.pallas_call(
        _psa_kernel,
        out_shape=jax.ShapeDtypeStruct((B, HW, C), jnp.float32),
        grid_spec=pltpu.PrefetchScalarGridSpec(
            num_scalar_prefetch=0,
            grid=(B // bb,),
            in_specs=[
                pl.BlockSpec((bb, HW, C), lambda i: (i, 0, 0)),   # x
                full((C, C)),    # w_chan = Wv @ Wz (folded)
                full((C, C)),    # sp_wq weight (Cin,Cout), cols zero-padded C/2->C
                full((C, C)),    # sp_wv weight^T, rows zero-padded C/2->C
                full((8, C)),    # packed row params (wq, b_chan, ln_g, ln_b, bsq, bsv)
            ],
            out_specs=pl.BlockSpec((bb, HW, C), lambda i: (i, 0, 0)),
        ),
        compiler_params=pltpu.CompilerParams(
            # With bb < B the batch axis shards across v7x's two TensorCores.
            dimension_semantics=("parallel",),
            # Current shapes need ~1.5 MiB; safe on every generation.
            # Scaling plan: tile HW (online softmax + partial means) once
            # 4 * bb * HW * C * 4 bytes approaches the scoped VMEM limit
            # (32 MiB scoped / 64 MiB physical on v7x).
            vmem_limit_bytes=16 * 1024 * 1024,
        ),
    )(x2, kp["w_chan"], kp["wsq"], kp["wsvt"], kp["slab"])
    return out.reshape(B, H, W, C)


# ----------------------------------------------------------------------------
# Parameters (PyTorch layout) + one-time folding/packing to kernel layout
# ----------------------------------------------------------------------------
def init_params(key, channel):
    c2 = channel // 2
    ks = jax.random.split(key, 6)

    def conv1x1_init(k, cout, cin):
        bound = 1.0 / np.sqrt(cin)
        kw, kb = jax.random.split(k)
        w = jax.random.uniform(kw, (cout, cin), jnp.float32, -bound, bound)
        b = jax.random.uniform(kb, (cout,), jnp.float32, -bound, bound)
        return w, b

    ch_wv_w, ch_wv_b = conv1x1_init(ks[0], c2, channel)
    ch_wq_w, ch_wq_b = conv1x1_init(ks[1], 1, channel)
    ch_wz_w, ch_wz_b = conv1x1_init(ks[2], channel, c2)
    sp_wv_w, sp_wv_b = conv1x1_init(ks[3], c2, channel)
    sp_wq_w, sp_wq_b = conv1x1_init(ks[4], c2, channel)
    kg, kb2 = jax.random.split(ks[5])
    ln_g = 1.0 + 0.1 * jax.random.normal(kg, (channel,), jnp.float32)
    ln_b = 0.1 * jax.random.normal(kb2, (channel,), jnp.float32)
    return {
        "ch_wv_w": ch_wv_w, "ch_wv_b": ch_wv_b,
        "ch_wq_w": ch_wq_w, "ch_wq_b": ch_wq_b,
        "ch_wz_w": ch_wz_w, "ch_wz_b": ch_wz_b,
        "sp_wv_w": sp_wv_w, "sp_wv_b": sp_wv_b,
        "sp_wq_w": sp_wq_w, "sp_wq_b": sp_wq_b,
        "ln_g": ln_g, "ln_b": ln_b,
    }


def prepare_kernel_params(p, channel):
    """One-time (outside jit) folding + packing.

    * Folds Wv@Wz and bv@Wz+bz for the collapsed channel branch (valid because
      sum(softmax)==1; fp error ~1 ulp).
    * Zero-pads all C/2-wide spatial weights/biases to C so kernel tensors stay
      128-lane dense.
    * Packs 6 row parameters into one (8, C) slab -> 5 pallas_call inputs total.
    * ch_wq bias is intentionally dropped (softmax over HW is shift-invariant).
    """
    c = channel
    c2 = c // 2
    hp = jax.lax.Precision.HIGHEST

    wv_k = jnp.transpose(p["ch_wv_w"])      # (C, C2)
    wz_k = jnp.transpose(p["ch_wz_w"])      # (C2, C)
    w_chan = jnp.dot(wv_k, wz_k, precision=hp)                                   # (C, C)
    b_chan = (jnp.dot(p["ch_wv_b"].reshape(1, c2), wz_k, precision=hp)
              + p["ch_wz_b"].reshape(1, c))                                      # (1, C)

    wsq_k = jnp.transpose(p["sp_wq_w"])     # (C, C2)
    wsq_pad = jnp.zeros((c, c), jnp.float32).at[:, :c2].set(wsq_k)               # (C, C)
    bsq_pad = jnp.zeros((c,), jnp.float32).at[:c2].set(p["sp_wq_b"])             # (C,)
    wsvt_pad = jnp.zeros((c, c), jnp.float32).at[:c2, :].set(p["sp_wv_w"])       # (C, C)
    bsv_pad = jnp.zeros((c,), jnp.float32).at[:c2].set(p["sp_wv_b"])             # (C,)

    slab = jnp.zeros((8, c), jnp.float32)
    slab = slab.at[0].set(p["ch_wq_w"].reshape(c))    # wq row
    slab = slab.at[1].set(b_chan.reshape(c))          # folded channel bias
    slab = slab.at[2].set(p["ln_g"])
    slab = slab.at[3].set(p["ln_b"])
    slab = slab.at[4].set(bsq_pad)
    slab = slab.at[5].set(bsv_pad)

    return {"w_chan": w_chan, "wsq": wsq_pad, "wsvt": wsvt_pad, "slab": slab}


# ----------------------------------------------------------------------------
# Pure-JAX reference (NCHW, mirrors the PyTorch forward line by line)
# ----------------------------------------------------------------------------
def psa_reference_nchw(x, p):
    b, c, h, w = x.shape
    c2 = c // 2
    hp = jax.lax.Precision.HIGHEST

    def conv1x1(t, wt, bt):
        return jnp.einsum("bchw,oc->bohw", t, wt, precision=hp) + bt[None, :, None, None]

    channel_wv = conv1x1(x, p["ch_wv_w"], p["ch_wv_b"]).reshape(b, c2, h * w)
    channel_wq = conv1x1(x, p["ch_wq_w"], p["ch_wq_b"]).reshape(b, h * w, 1)
    channel_wq = jax.nn.softmax(channel_wq, axis=1)
    channel_wz = jnp.matmul(channel_wv, channel_wq, precision=hp)[..., None]     # (b, c2, 1, 1)
    cw = conv1x1(channel_wz, p["ch_wz_w"], p["ch_wz_b"]).reshape(b, c, 1)
    cw = jnp.transpose(cw, (0, 2, 1))                                            # (b, 1, c)
    mu = jnp.mean(cw, axis=-1, keepdims=True)
    var = jnp.mean(jnp.square(cw - mu), axis=-1, keepdims=True)
    ln = (cw - mu) / jnp.sqrt(var + _LN_EPS) * p["ln_g"] + p["ln_b"]
    channel_weight = jax.nn.sigmoid(ln)
    channel_weight = jnp.transpose(channel_weight, (0, 2, 1)).reshape(b, c, 1, 1)
    channel_out = channel_weight * x

    spatial_wv = conv1x1(channel_out, p["sp_wv_w"], p["sp_wv_b"]).reshape(b, c2, h * w)
    spatial_wq = conv1x1(channel_out, p["sp_wq_w"], p["sp_wq_b"])
    spatial_wq = jnp.mean(spatial_wq, axis=(2, 3)).reshape(b, 1, c2)              # agp((1,1))
    spatial_wz = jnp.matmul(spatial_wq, spatial_wv, precision=hp)                 # (b, 1, hw)
    spatial_weight = jax.nn.sigmoid(spatial_wz.reshape(b, 1, h, w))
    spatial_out = spatial_weight * channel_out
    return spatial_out + channel_out


# ----------------------------------------------------------------------------
# Driver
# ----------------------------------------------------------------------------
if __name__ == "__main__":
    key = jax.random.PRNGKey(0)
    B, C, H, W = 2, 128, 16, 16          # small but lane-friendly (C multiple of 128)

    k_x, k_p = jax.random.split(key)
    x_nchw = jax.random.normal(k_x, (B, C, H, W), jnp.float32)
    params = init_params(k_p, C)
    kparams = prepare_kernel_params(params, C)   # one-time weight folding/packing

    fwd = jax.jit(psa_forward_nhwc)
    x_nhwc = jnp.transpose(x_nchw, (0, 2, 3, 1))
    out_nhwc = fwd(x_nhwc, kparams)
    out_nchw = jnp.transpose(out_nhwc, (0, 3, 1, 2))
    jax.block_until_ready(out_nchw)
    assert out_nchw.shape == (B, C, H, W)

    # Correctness check against a pure-JAX mirror of the PyTorch forward.
    ref = jax.jit(psa_reference_nchw)(x_nchw, params)
    jax.block_until_ready(ref)
    np.testing.assert_allclose(np.asarray(out_nchw), np.asarray(ref),
                               atol=1e-3, rtol=1e-3)

    print("KERNEL_OK")
</pallas_src>

<mosaic_0001>
module attributes {stable_mosaic.version = 11 : i64} {
  func.func @_psa_kernel(%arg0: i32, %arg1: memref<2x256x128xf32, #tpu.memory_space<vmem>>, %arg2: memref<128x128xf32, #tpu.memory_space<vmem>>, %arg3: memref<128x128xf32, #tpu.memory_space<vmem>>, %arg4: memref<128x128xf32, #tpu.memory_space<vmem>>, %arg5: memref<8x128xf32, #tpu.memory_space<vmem>>, %arg6: memref<2x256x128xf32, #tpu.memory_space<vmem>>) attributes {dimension_semantics = [#tpu.dimension_semantics<parallel>], iteration_bounds = array<i64: 1>, scalar_prefetch = 0 : i64, scratch_operands = 0 : i64, tpu.core_type = #tpu.core_type<tc>, window_params = [{transform_indices = @transform_0, window_bounds = array<i64: 2, 256, 128>}, {pipeline_mode = #tpu.pipeline_mode<synchronous>, transform_indices = @transform_1, window_bounds = array<i64: 128, 128>}, {pipeline_mode = #tpu.pipeline_mode<synchronous>, transform_indices = @transform_2, window_bounds = array<i64: 128, 128>}, {pipeline_mode = #tpu.pipeline_mode<synchronous>, transform_indices = @transform_3, window_bounds = array<i64: 128, 128>}, {pipeline_mode = #tpu.pipeline_mode<synchronous>, transform_indices = @transform_4, window_bounds = array<i64: 8, 128>}, {transform_indices = @transform_5, window_bounds = array<i64: 2, 256, 128>}]} {
    %c0 = arith.constant 0 : index
    %c0_0 = arith.constant 0 : index
    %0 = vector.load %arg5[%c0, %c0_0] : memref<8x128xf32, #tpu.memory_space<vmem>>, vector<8x128xf32>
    %1 = vector.extract_strided_slice %0 {offsets = [0, 0], sizes = [1, 128], strides = [1, 1]} : vector<8x128xf32> to vector<1x128xf32>
    %2 = vector.extract_strided_slice %0 {offsets = [1, 0], sizes = [1, 128], strides = [1, 1]} : vector<8x128xf32> to vector<1x128xf32>
    %3 = vector.extract_strided_slice %0 {offsets = [2, 0], sizes = [1, 128], strides = [1, 1]} : vector<8x128xf32> to vector<1x128xf32>
    %4 = vector.extract_strided_slice %0 {offsets = [3, 0], sizes = [1, 128], strides = [1, 1]} : vector<8x128xf32> to vector<1x128xf32>
    %5 = vector.extract_strided_slice %0 {offsets = [4, 0], sizes = [1, 128], strides = [1, 1]} : vector<8x128xf32> to vector<1x128xf32>
    %6 = vector.extract_strided_slice %0 {offsets = [5, 0], sizes = [1, 128], strides = [1, 1]} : vector<8x128xf32> to vector<1x128xf32>
    %c0_1 = arith.constant 0 : index
    %c0_2 = arith.constant 0 : index
    %7 = vector.load %arg2[%c0_1, %c0_2] : memref<128x128xf32, #tpu.memory_space<vmem>>, vector<128x128xf32>
    %c0_3 = arith.constant 0 : index
    %c0_4 = arith.constant 0 : index
    %8 = vector.load %arg3[%c0_3, %c0_4] : memref<128x128xf32, #tpu.memory_space<vmem>>, vector<128x128xf32>
    %c0_5 = arith.constant 0 : index
    %c0_6 = arith.constant 0 : index
    %9 = vector.load %arg4[%c0_5, %c0_6] : memref<128x128xf32, #tpu.memory_space<vmem>>, vector<128x128xf32>
    %c0_7 = arith.constant 0 : index
    %c0_8 = arith.constant 0 : index
    %c0_9 = arith.constant 0 : index
    %10 = vector.load %arg1[%c0_7, %c0_8, %c0_9] : memref<2x256x128xf32, #tpu.memory_space<vmem>>, vector<1x256x128xf32>
    %11 = vector.shape_cast %10 : vector<1x256x128xf32> to vector<256x128xf32>
    %12 = vector.broadcast %1 : vector<1x128xf32> to vector<256x128xf32>
    %13 = arith.mulf %11, %12 : vector<256x128xf32>
    %cst = arith.constant dense<0.000000e+00> : vector<256xf32>
    %14 = vector.multi_reduction <add>, %13, %cst [1] : vector<256x128xf32> to vector<256xf32>
    %15 = vector.shape_cast %14 : vector<256xf32> to vector<256x1xf32>
    %cst_10 = arith.constant dense<0xFF800000> : vector<1xf32>
    %16 = vector.multi_reduction <maximumf>, %15, %cst_10 [0] : vector<256x1xf32> to vector<1xf32>
    %17 = vector.shape_cast %16 : vector<1xf32> to vector<1x1xf32>
    %18 = vector.broadcast %17 : vector<1x1xf32> to vector<256x1xf32>
    %19 = arith.subf %15, %18 : vector<256x1xf32>
    %20 = math.exp %19 : vector<256x1xf32>
    %cst_11 = arith.constant dense<0.000000e+00> : vector<1xf32>
    %21 = vector.multi_reduction <add>, %20, %cst_11 [0] : vector<256x1xf32> to vector<1xf32>
    %22 = vector.shape_cast %21 : vector<1xf32> to vector<1x1xf32>
    %23 = vector.broadcast %20 : vector<256x1xf32> to vector<256x128xf32>
    %24 = arith.mulf %11, %23 : vector<256x128xf32>
    %cst_12 = arith.constant dense<0.000000e+00> : vector<128xf32>
    %25 = vector.multi_reduction <add>, %24, %cst_12 [0] : vector<256x128xf32> to vector<128xf32>
    %26 = vector.shape_cast %25 : vector<128xf32> to vector<1x128xf32>
    %27 = vector.broadcast %22 : vector<1x1xf32> to vector<1x128xf32>
    %28 = arith.divf %26, %27 : vector<1x128xf32>
    %cst_13 = arith.constant dense<0.000000e+00> : vector<1x128xf32>
    %29 = tpu.matmul %28, %7, %cst_13 {dimension_numbers = #tpu.dot_dimension_numbers<[1], [0], [0], [1], [0, 0, 1, 1], [], []>} : vector<1x128xf32>, vector<128x128xf32>, vector<1x128xf32> -> vector<1x128xf32>
    %30 = arith.addf %29, %2 : vector<1x128xf32>
    %cst_14 = arith.constant dense<0.000000e+00> : vector<1xf32>
    %31 = vector.multi_reduction <add>, %30, %cst_14 [1] : vector<1x128xf32> to vector<1xf32>
    %32 = vector.shape_cast %31 : vector<1xf32> to vector<1x1xf32>
    %cst_15 = arith.constant 1.280000e+02 : f32
    %33 = vector.broadcast %cst_15 : f32 to vector<1x1xf32>
    %34 = arith.divf %32, %33 : vector<1x1xf32>
    %35 = vector.broadcast %34 : vector<1x1xf32> to vector<1x128xf32>
    %36 = arith.subf %30, %35 : vector<1x128xf32>
    %37 = arith.mulf %36, %36 : vector<1x128xf32>
    %cst_16 = arith.constant dense<0.000000e+00> : vector<1xf32>
    %38 = vector.multi_reduction <add>, %37, %cst_16 [1] : vector<1x128xf32> to vector<1xf32>
    %39 = vector.shape_cast %38 : vector<1xf32> to vector<1x1xf32>
    %cst_17 = arith.constant 1.280000e+02 : f32
    %40 = vector.broadcast %cst_17 : f32 to vector<1x1xf32>
    %41 = arith.divf %39, %40 : vector<1x1xf32>
    %42 = vector.broadcast %34 : vector<1x1xf32> to vector<1x128xf32>
    %43 = arith.subf %30, %42 : vector<1x128xf32>
    %cst_18 = arith.constant 9.99999974E-6 : f32
    %44 = vector.broadcast %cst_18 : f32 to vector<1x1xf32>
    %45 = arith.addf %41, %44 : vector<1x1xf32>
    %46 = math.rsqrt %45 : vector<1x1xf32>
    %47 = vector.broadcast %46 : vector<1x1xf32> to vector<1x128xf32>
    %48 = arith.mulf %43, %47 : vector<1x128xf32>
    %49 = arith.mulf %48, %3 : vector<1x128xf32>
    %50 = arith.addf %49, %4 : vector<1x128xf32>
    %51 = arith.negf %50 : vector<1x128xf32>
    %52 = math.exp %51 : vector<1x128xf32>
    %cst_19 = arith.constant 1.000000e+00 : f32
    %53 = vector.broadcast %cst_19 : f32 to vector<1x128xf32>
    %54 = arith.addf %53, %52 : vector<1x128xf32>
    %55 = arith.divf %53, %54 : vector<1x128xf32>
    %56 = vector.broadcast %55 : vector<1x128xf32> to vector<256x128xf32>
    %57 = arith.mulf %11, %56 : vector<256x128xf32>
    %cst_20 = arith.constant dense<0.000000e+00> : vector<128xf32>
    %58 = vector.multi_reduction <add>, %57, %cst_20 [0] : vector<256x128xf32> to vector<128xf32>
    %59 = vector.shape_cast %58 : vector<128xf32> to vector<1x128xf32>
    %cst_21 = arith.constant 2.560000e+02 : f32
    %60 = vector.broadcast %cst_21 : f32 to vector<1x128xf32>
    %61 = arith.divf %59, %60 : vector<1x128xf32>
    %cst_22 = arith.constant dense<0.000000e+00> : vector<1x128xf32>
    %62 = tpu.matmul %61, %8, %cst_22 {dimension_numbers = #tpu.dot_dimension_numbers<[1], [0], [0], [1], [0, 0, 1, 1], [], []>} : vector<1x128xf32>, vector<128x128xf32>, vector<1x128xf32> -> vector<1x128xf32>
    %63 = arith.addf %62, %5 : vector<1x128xf32>
    %cst_23 = arith.constant dense<0.000000e+00> : vector<1x128xf32>
    %64 = tpu.matmul %63, %9, %cst_23 {dimension_numbers = #tpu.dot_dimension_numbers<[1], [0], [0], [1], [0, 0, 1, 1], [], []>} : vector<1x128xf32>, vector<128x128xf32>, vector<1x128xf32> -> vector<1x128xf32>
    %65 = arith.mulf %63, %6 : vector<1x128xf32>
    %cst_24 = arith.constant dense<0.000000e+00> : vector<1xf32>
    %66 = vector.multi_reduction <add>, %65, %cst_24 [1] : vector<1x128xf32> to vector<1xf32>
    %67 = vector.shape_cast %66 : vector<1xf32> to vector<1x1xf32>
    %68 = vector.broadcast %64 : vector<1x128xf32> to vector<256x128xf32>
    %69 = arith.mulf %57, %68 : vector<256x128xf32>
    %cst_25 = arith.constant dense<0.000000e+00> : vector<256xf32>
    %70 = vector.multi_reduction <add>, %69, %cst_25 [1] : vector<256x128xf32> to vector<256xf32>
    %71 = vector.shape_cast %70 : vector<256xf32> to vector<256x1xf32>
    %72 = vector.broadcast %67 : vector<1x1xf32> to vector<256x1xf32>
    %73 = arith.addf %71, %72 : vector<256x1xf32>
    %74 = arith.negf %73 : vector<256x1xf32>
    %75 = math.exp %74 : vector<256x1xf32>
    %cst_26 = arith.constant 1.000000e+00 : f32
    %76 = vector.broadcast %cst_26 : f32 to vector<256x1xf32>
    %77 = arith.addf %76, %75 : vector<256x1xf32>
    %78 = arith.divf %76, %77 : vector<256x1xf32>
    %cst_27 = arith.constant 1.000000e+00 : f32
    %79 = vector.broadcast %cst_27 : f32 to vector<256x1xf32>
    %80 = arith.addf %79, %78 : vector<256x1xf32>
    %81 = vector.broadcast %80 : vector<256x1xf32> to vector<256x128xf32>
    %82 = arith.mulf %57, %81 : vector<256x128xf32>
    %c0_28 = arith.constant 0 : index
    %c0_29 = arith.constant 0 : index
    %c0_30 = arith.constant 0 : index
    %83 = vector.load %arg6[%c0_28, %c0_29, %c0_30] : memref<2x256x128xf32, #tpu.memory_space<vmem>>, vector<1x256x128xf32>
    %84 = vector.shape_cast %83 : vector<1x256x128xf32> to vector<256x128xf32>
    %85 = vector.shape_cast %82 : vector<256x128xf32> to vector<1x256x128xf32>
    tpu.vector_store %arg6[%c0_28, %c0_29, %c0_30], %85 {strides = array<i32>} : memref<2x256x128xf32, #tpu.memory_space<vmem>>, vector<1x256x128xf32>,
    %c1 = arith.constant 1 : index
    %c0_31 = arith.constant 0 : index
    %c0_32 = arith.constant 0 : index
    %86 = vector.load %arg1[%c1, %c0_31, %c0_32] : memref<2x256x128xf32, #tpu.memory_space<vmem>>, vector<1x256x128xf32>
    %87 = vector.shape_cast %86 : vector<1x256x128xf32> to vector<256x128xf32>
    %88 = vector.broadcast %1 : vector<1x128xf32> to vector<256x128xf32>
    %89 = arith.mulf %87, %88 : vector<256x128xf32>
    %cst_33 = arith.constant dense<0.000000e+00> : vector<256xf32>
    %90 = vector.multi_reduction <add>, %89, %cst_33 [1] : vector<256x128xf32> to vector<256xf32>
    %91 = vector.shape_cast %90 : vector<256xf32> to vector<256x1xf32>
    %cst_34 = arith.constant dense<0xFF800000> : vector<1xf32>
    %92 = vector.multi_reduction <maximumf>, %91, %cst_34 [0] : vector<256x1xf32> to vector<1xf32>
    %93 = vector.shape_cast %92 : vector<1xf32> to vector<1x1xf32>
    %94 = vector.broadcast %93 : vector<1x1xf32> to vector<256x1xf32>
    %95 = arith.subf %91, %94 : vector<256x1xf32>
    %96 = math.exp %95 : vector<256x1xf32>
    %cst_35 = arith.constant dense<0.000000e+00> : vector<1xf32>
    %97 = vector.multi_reduction <add>, %96, %cst_35 [0] : vector<256x1xf32> to vector<1xf32>
    %98 = vector.shape_cast %97 : vector<1xf32> to vector<1x1xf32>
    %99 = vector.broadcast %96 : vector<256x1xf32> to vector<256x128xf32>
    %100 = arith.mulf %87, %99 : vector<256x128xf32>
    %cst_36 = arith.constant dense<0.000000e+00> : vector<128xf32>
    %101 = vector.multi_reduction <add>, %100, %cst_36 [0] : vector<256x128xf32> to vector<128xf32>
    %102 = vector.shape_cast %101 : vector<128xf32> to vector<1x128xf32>
    %103 = vector.broadcast %98 : vector<1x1xf32> to vector<1x128xf32>
    %104 = arith.divf %102, %103 : vector<1x128xf32>
    %cst_37 = arith.constant dense<0.000000e+00> : vector<1x128xf32>
    %105 = tpu.matmul %104, %7, %cst_37 {dimension_numbers = #tpu.dot_dimension_numbers<[1], [0], [0], [1], [0, 0, 1, 1], [], []>} : vector<1x128xf32>, vector<128x128xf32>, vector<1x128xf32> -> vector<1x128xf32>
    %106 = arith.addf %105, %2 : vector<1x128xf32>
    %cst_38 = arith.constant dense<0.000000e+00> : vector<1xf32>
    %107 = vector.multi_reduction <add>, %106, %cst_38 [1] : vector<1x128xf32> to vector<1xf32>
    %108 = vector.shape_cast %107 : vector<1xf32> to vector<1x1xf32>
    %cst_39 = arith.constant 1.280000e+02 : f32
    %109 = vector.broadcast %cst_39 : f32 to vector<1x1xf32>
    %110 = arith.divf %108, %109 : vector<1x1xf32>
    %111 = vector.broadcast %110 : vector<1x1xf32> to vector<1x128xf32>
    %112 = arith.subf %106, %111 : vector<1x128xf32>
    %113 = arith.mulf %112, %112 : vector<1x128xf32>
    %cst_40 = arith.constant dense<0.000000e+00> : vector<1xf32>
    %114 = vector.multi_reduction <add>, %113, %cst_40 [1] : vector<1x128xf32> to vector<1xf32>
    %115 = vector.shape_cast %114 : vector<1xf32> to vector<1x1xf32>
    %cst_41 = arith.constant 1.280000e+02 : f32
    %116 = vector.broadcast %cst_41 : f32 to vector<1x1xf32>
    %117 = arith.divf %115, %116 : vector<1x1xf32>
    %118 = vector.broadcast %110 : vector<1x1xf32> to vector<1x128xf32>
    %119 = arith.subf %106, %118 : vector<1x128xf32>
    %cst_42 = arith.constant 9.99999974E-6 : f32
    %120 = vector.broadcast %cst_42 : f32 to vector<1x1xf32>
    %121 = arith.addf %117, %120 : vector<1x1xf32>
    %122 = math.rsqrt %121 : vector<1x1xf32>
    %123 = vector.broadcast %122 : vector<1x1xf32> to vector<1x128xf32>
    %124 = arith.mulf %119, %123 : vector<1x128xf32>
    %125 = arith.mulf %124, %3 : vector<1x128xf32>
    %126 = arith.addf %125, %4 : vector<1x128xf32>
    %127 = arith.negf %126 : vector<1x128xf32>
    %128 = math.exp %127 : vector<1x128xf32>
    %cst_43 = arith.constant 1.000000e+00 : f32
    %129 = vector.broadcast %cst_43 : f32 to vector<1x128xf32>
    %130 = arith.addf %129, %128 : vector<1x128xf32>
    %131 = arith.divf %129, %130 : vector<1x128xf32>
    %132 = vector.broadcast %131 : vector<1x128xf32> to vector<256x128xf32>
    %133 = arith.mulf %87, %132 : vector<256x128xf32>
    %cst_44 = arith.constant dense<0.000000e+00> : vector<128xf32>
    %134 = vector.multi_reduction <add>, %133, %cst_44 [0] : vector<256x128xf32> to vector<128xf32>
    %135 = vector.shape_cast %134 : vector<128xf32> to vector<1x128xf32>
    %cst_45 = arith.constant 2.560000e+02 : f32
    %136 = vector.broadcast %cst_45 : f32 to vector<1x128xf32>
    %137 = arith.divf %135, %136 : vector<1x128xf32>
    %cst_46 = arith.constant dense<0.000000e+00> : vector<1x128xf32>
    %138 = tpu.matmul %137, %8, %cst_46 {dimension_numbers = #tpu.dot_dimension_numbers<[1], [0], [0], [1], [0, 0, 1, 1], [], []>} : vector<1x128xf32>, vector<128x128xf32>, vector<1x128xf32> -> vector<1x128xf32>
    %139 = arith.addf %138, %5 : vector<1x128xf32>
    %cst_47 = arith.constant dense<0.000000e+00> : vector<1x128xf32>
    %140 = tpu.matmul %139, %9, %cst_47 {dimension_numbers = #tpu.dot_dimension_numbers<[1], [0], [0], [1], [0, 0, 1, 1], [], []>} : vector<1x128xf32>, vector<128x128xf32>, vector<1x128xf32> -> vector<1x128xf32>
    %141 = arith.mulf %139, %6 : vector<1x128xf32>
    %cst_48 = arith.constant dense<0.000000e+00> : vector<1xf32>
    %142 = vector.multi_reduction <add>, %141, %cst_48 [1] : vector<1x128xf32> to vector<1xf32>
    %143 = vector.shape_cast %142 : vector<1xf32> to vector<1x1xf32>
    %144 = vector.broadcast %140 : vector<1x128xf32> to vector<256x128xf32>
    %145 = arith.mulf %133, %144 : vector<256x128xf32>
    %cst_49 = arith.constant dense<0.000000e+00> : vector<256xf32>
    %146 = vector.multi_reduction <add>, %145, %cst_49 [1] : vector<256x128xf32> to vector<256xf32>
    %147 = vector.shape_cast %146 : vector<256xf32> to vector<256x1xf32>
    %148 = vector.broadcast %143 : vector<1x1xf32> to vector<256x1xf32>
    %149 = arith.addf %147, %148 : vector<256x1xf32>
    %150 = arith.negf %149 : vector<256x1xf32>
    %151 = math.exp %150 : vector<256x1xf32>
    %cst_50 = arith.constant 1.000000e+00 : f32
    %152 = vector.broadcast %cst_50 : f32 to vector<256x1xf32>
    %153 = arith.addf %152, %151 : vector<256x1xf32>
    %154 = arith.divf %152, %153 : vector<256x1xf32>
    %cst_51 = arith.constant 1.000000e+00 : f32
    %155 = vector.broadcast %cst_51 : f32 to vector<256x1xf32>
    %156 = arith.addf %155, %154 : vector<256x1xf32>
    %157 = vector.broadcast %156 : vector<256x1xf32> to vector<256x128xf32>
    %158 = arith.mulf %133, %157 : vector<256x128xf32>
    %c1_52 = arith.constant 1 : index
    %c0_53 = arith.constant 0 : index
    %c0_54 = arith.constant 0 : index
    %159 = vector.load %arg6[%c1_52, %c0_53, %c0_54] : memref<2x256x128xf32, #tpu.memory_space<vmem>>, vector<1x256x128xf32>
    %160 = vector.shape_cast %159 : vector<1x256x128xf32> to vector<256x128xf32>
    %161 = vector.shape_cast %158 : vector<256x128xf32> to vector<1x256x128xf32>
    tpu.vector_store %arg6[%c1_52, %c0_53, %c0_54], %161 {strides = array<i32>} : memref<2x256x128xf32, #tpu.memory_space<vmem>>, vector<1x256x128xf32>,
    return
  }
  func.func @transform_0(%arg0: i32) -> (i32, i32, i32) {
    %c0_i32 = arith.constant 0 : i32
    %c0_i32_0 = arith.constant 0 : i32
    %c0_i32_1 = arith.constant 0 : i32
    return %arg0, %c0_i32, %c0_i32_0 : i32, i32, i32
  }
  func.func @transform_1(%arg0: i32) -> (i32, i32) {
    %c0_i32 = arith.constant 0 : i32
    %c0_i32_0 = arith.constant 0 : i32
    %c0_i32_1 = arith.constant 0 : i32
    return %c0_i32, %c0_i32_0 : i32, i32
  }
  func.func @transform_2(%arg0: i32) -> (i32, i32) {
    %c0_i32 = arith.constant 0 : i32
    %c0_i32_0 = arith.constant 0 : i32
    %c0_i32_1 = arith.constant 0 : i32
    return %c0_i32, %c0_i32_0 : i32, i32
  }
  func.func @transform_3(%arg0: i32) -> (i32, i32) {
    %c0_i32 = arith.constant 0 : i32
    %c0_i32_0 = arith.constant 0 : i32
    %c0_i32_1 = arith.constant 0 : i32
    return %c0_i32, %c0_i32_0 : i32, i32
  }
  func.func @transform_4(%arg0: i32) -> (i32, i32) {
    %c0_i32 = arith.constant 0 : i32
    %c0_i32_0 = arith.constant 0 : i32
    %c0_i32_1 = arith.constant 0 : i32
    return %c0_i32, %c0_i32_0 : i32, i32
  }
  func.func @transform_5(%arg0: i32) -> (i32, i32, i32) {
    %c0_i32 = arith.constant 0 : i32
    %c0_i32_0 = arith.constant 0 : i32
    %c0_i32_1 = arith.constant 0 : i32
    return %arg0, %c0_i32, %c0_i32_0 : i32, i32, i32
  }
}

</mosaic_0001>

<llo_original>
// kernel: psa_forward_nhwc.1
$region0: #{psa_forward_nhwc.1}
  #allocation0 [shape = 'u32[]', space=smem, size = 0x4, offset = 0x4, fixed_abs, tag = 'smem constant byte address 0x4 - core index']
  #allocation1 [shape = 'u32[144,128]{1,0:T(1,128)}', space=vmem, size = 0x12000, scoped, tag = 'internal scratch']
  %s0 = inlined_call_operand.hbm [shape: f32[2,256,128], index: 0, kind: input, shape index: {}]
  %s1 = inlined_call_operand.hbm [shape: f32[128,128], index: 1, kind: input, shape index: {}]
  %s2 = inlined_call_operand.hbm [shape: f32[128,128], index: 2, kind: input, shape index: {}]
  %s3 = inlined_call_operand.hbm [shape: f32[128,128], index: 3, kind: input, shape index: {}]
  %s4 = inlined_call_operand.hbm [shape: f32[8,128], index: 4, kind: input, shape index: {}]
  %s5 = inlined_call_operand.hbm [shape: f32[2,256,128], index: 5, kind: output, shape index: {}]
  %s6 = sld [smem:[#allocation0]]
  $region50: #{psa_forward_nhwc.1} parent=0
    _
  %s8 = ssub.s32 1, %s6
  %s9 = scalar_select 0, %s8, %s6
  $region1: #{psa_forward_nhwc.1} parent=0
    #allocation2 [shape = 'u8[262144]{0}', space=vmem, size = 0x40000, scoped, tag = 'input window, operand 0, single buffered']
    #allocation3 [shape = 's32[1]{0}', space=sflag, size = 0x4, scoped, tag = 'scoped memory for psa_forward_nhwc.1']
    #allocation4 [shape = 's32[1]{0}', space=sflag, size = 0x4, scoped, tag = 'scoped memory for psa_forward_nhwc.1']
    #allocation5 [shape = 'u8[65536]{0}', space=vmem, size = 0x10000, scoped, tag = 'input window, operand 1, single buffered']
    #allocation6 [shape = 's32[1]{0}', space=sflag, size = 0x4, scoped, tag = 'scoped memory for psa_forward_nhwc.1']
    #allocation7 [shape = 'u8[65536]{0}', space=vmem, size = 0x10000, scoped, tag = 'input window, operand 2, single buffered']
    #allocation8 [shape = 'u8[65536]{0}', space=vmem, size = 0x10000, scoped, tag = 'input window, operand 3, single buffered']
    #allocation9 [shape = 's32[1]{0}', space=sflag, size = 0x4, scoped, tag = 'scoped memory for psa_forward_nhwc.1']
    #allocation10 [shape = 'u8[4096]{0}', space=vmem, size = 0x1000, scoped, tag = 'input window, operand 4, single buffered']
    #allocation11 [shape = 'u8[262144]{0}', space=vmem, size = 0x40000, scoped, tag = 'output window, operand 0, single buffered']
    %10 = vsyncpa [#allocation3], 0
    %11 = vsyncpa [#allocation6], 0
    %12 = vsyncpa [#allocation9], 0
    %13 = vsyncpa [#allocation4], 0
    // Predicated region
    $region2: #{psa_forward_nhwc.1} parent=1 // pred_check
      _
    $region3: #{psa_forward_nhwc.1} parent=1 // pred_check_branch
      %15 = sbr.rel (0) target = $region5
    $region4: #{psa_forward_nhwc.1} parent=1 // pred_region
      %s17 = ssub.s32 8192, 8192
      %18 = vsyncadd [#allocation3], %s17
      %s19 = sshll.u32 [#allocation2], 4
      %s20 = int_to_ptr.vmem [resolvable:$true] %s19
      %25 = dma.hbm_to_vmem [thread:$0]  %s0, 8192, %s20, [#allocation3], 128, 128, 8
    $region5: #{psa_forward_nhwc.1} parent=1 // pred_fallthru
      _
    // Predicated region
    $region6: #{psa_forward_nhwc.1} parent=1 // pred_check
      _
    $region7: #{psa_forward_nhwc.1} parent=1 // pred_check_branch
      %27 = sbr.rel (0) target = $region9
    $region8: #{psa_forward_nhwc.1} parent=1 // pred_region
      %s29 = ssub.s32 2048, 2048
      %30 = vsyncadd [#allocation6], %s29
      %s31 = sshll.u32 [#allocation5], 4
      %s32 = int_to_ptr.vmem [resolvable:$true] %s31
      %37 = dma.hbm_to_vmem [thread:$0]  %s1, 2048, %s32, [#allocation6], 128, 128, 8
    $region9: #{psa_forward_nhwc.1} parent=1 // pred_fallthru
      _
    // Predicated region
    $region10: #{psa_forward_nhwc.1} parent=1 // pred_check
      _
    $region11: #{psa_forward_nhwc.1} parent=1 // pred_check_branch
      %39 = sbr.rel (0) target = $region13
    $region12: #{psa_forward_nhwc.1} parent=1 // pred_region
      %s41 = ssub.s32 2048, 2048
      %42 = vsyncadd [#allocation6], %s41
      %s43 = sshll.u32 [#allocation7], 4
      %s44 = int_to_ptr.vmem [resolvable:$true] %s43
      %49 = dma.hbm_to_vmem [thread:$0]  %s2, 2048, %s44, [#allocation6], 128, 128, 8
    $region13: #{psa_forward_nhwc.1} parent=1 // pred_fallthru
      _
    // Predicated region
    $region14: #{psa_forward_nhwc.1} parent=1 // pred_check
      _
    $region15: #{psa_forward_nhwc.1} parent=1 // pred_check_branch
      %51 = sbr.rel (0) target = $region17
    $region16: #{psa_forward_nhwc.1} parent=1 // pred_region
      %s53 = ssub.s32 2048, 2048
      %54 = vsyncadd [#allocation9], %s53
      %s55 = sshll.u32 [#allocation8], 4
      %s56 = int_to_ptr.vmem [resolvable:$true] %s55
      %61 = dma.hbm_to_vmem [thread:$0]  %s3, 2048, %s56, [#allocation9], 128, 128, 8
    $region17: #{psa_forward_nhwc.1} parent=1 // pred_fallthru
      _
    // Predicated region
    $region18: #{psa_forward_nhwc.1} parent=1 // pred_check
      _
    $region19: #{psa_forward_nhwc.1} parent=1 // pred_check_branch
      %63 = sbr.rel (0) target = $region21
    $region20: #{psa_forward_nhwc.1} parent=1 // pred_region
      %s65 = ssub.s32 128, 128
      %66 = vsyncadd [#allocation9], %s65
      %s68 = sshll.u32 [#allocation10], 4
      %s69 = int_to_ptr.vmem [resolvable:$true] %s68
      %71 = dma.hbm_to_vmem [thread:$0]  %s4, 128, %s69, [#allocation9]
    $region21: #{psa_forward_nhwc.1} parent=1 // pred_fallthru
      _
    // Predicated region
    $region22: #{psa_forward_nhwc.1} parent=1 // pred_check
      _
    $region23: #{psa_forward_nhwc.1} parent=1 // pred_check_branch
      %73 = sbr.rel (0) target = $region25
    $region24: #{psa_forward_nhwc.1} parent=1 // pred_region
      %74 = dma.done [#allocation3], 8192
    $region25: #{psa_forward_nhwc.1} parent=1 // pred_fallthru
      _
    // Predicated region
    $region26: #{psa_forward_nhwc.1} parent=1 // pred_check
      _
    $region27: #{psa_forward_nhwc.1} parent=1 // pred_check_branch
      %76 = sbr.rel (0) target = $region29
    $region28: #{psa_forward_nhwc.1} parent=1 // pred_region
      %77 = dma.done [#allocation6], 2048
    $region29: #{psa_forward_nhwc.1} parent=1 // pred_fallthru
      _
    // Predicated region
    $region30: #{psa_forward_nhwc.1} parent=1 // pred_check
      _
    $region31: #{psa_forward_nhwc.1} parent=1 // pred_check_branch
      %79 = sbr.rel (0) target = $region33
    $region32: #{psa_forward_nhwc.1} parent=1 // pred_region
      %80 = dma.done [#allocation6], 2048
    $region33: #{psa_forward_nhwc.1} parent=1 // pred_fallthru
      _
    // Predicated region
    $region34: #{psa_forward_nhwc.1} parent=1 // pred_check
      _
    $region35: #{psa_forward_nhwc.1} parent=1 // pred_check_branch
      %82 = sbr.rel (0) target = $region37
    $region36: #{psa_forward_nhwc.1} parent=1 // pred_region
      %83 = dma.done [#allocation9], 2048
    $region37: #{psa_forward_nhwc.1} parent=1 // pred_fallthru
      _
    // Predicated region
    $region38: #{psa_forward_nhwc.1} parent=1 // pred_check
      _
    $region39: #{psa_forward_nhwc.1} parent=1 // pred_check_branch
      %85 = sbr.rel (0) target = $region41
    $region40: #{psa_forward_nhwc.1} parent=1 // pred_region
      %86 = dma.done [#allocation9], 128
    $region41: #{psa_forward_nhwc.1} parent=1 // pred_fallthru
      _
    %v87 = vld [vmem:[#allocation10] sm:$0xff]
    %v88 = vld [vmem:[#allocation5] sm:$0xff]
    %v89 = vld [vmem:[#allocation5 + $0x8] sm:$0xff]
    %v90 = vld [vmem:[#allocation5 + $0x10] sm:$0xff]
    %v91 = vld [vmem:[#allocation5 + $0x18] sm:$0xff]
    %v92 = vld [vmem:[#allocation5 + $0x20] sm:$0xff]
    %v93 = vld [vmem:[#allocation5 + $0x28] sm:$0xff]
    %v94 = vld [vmem:[#allocation5 + $0x30] sm:$0xff]
    %v95 = vld [vmem:[#allocation5 + $0x38] sm:$0xff]
    %v96 = vld [vmem:[#allocation5 + $0x40] sm:$0xff]
    %v97 = vld [vmem:[#allocation5 + $0x48] sm:$0xff]
    %v98 = vld [vmem:[#allocation5 + $0x50] sm:$0xff]
    %v99 = vld [vmem:[#allocation5 + $0x58] sm:$0xff]
    %v100 = vld [vmem:[#allocation5 + $0x60] sm:$0xff]
    %v101 = vld [vmem:[#allocation5 + $0x68] sm:$0xff]
    %v102 = vld [vmem:[#allocation5 + $0x70] sm:$0xff]
    %v103 = vld [vmem:[#allocation5 + $0x78] sm:$0xff]
    %v104 = vld [vmem:[#allocation7] sm:$0xff]
    %v105 = vld [vmem:[#allocation7 + $0x8] sm:$0xff]
    %v106 = vld [vmem:[#allocation7 + $0x10] sm:$0xff]
    %v107 = vld [vmem:[#allocation7 + $0x18] sm:$0xff]
    %v108 = vld [vmem:[#allocation7 + $0x20] sm:$0xff]
    %v109 = vld [vmem:[#allocation7 + $0x28] sm:$0xff]
    %v110 = vld [vmem:[#allocation7 + $0x30] sm:$0xff]
    %v111 = vld [vmem:[#allocation7 + $0x38] sm:$0xff]
    %v112 = vld [vmem:[#allocation7 + $0x40] sm:$0xff]
    %v113 = vld [vmem:[#allocation7 + $0x48] sm:$0xff]
    %v114 = vld [vmem:[#allocation7 + $0x50] sm:$0xff]
    %v115 = vld [vmem:[#allocation7 + $0x58] sm:$0xff]
    %v116 = vld [vmem:[#allocation7 + $0x60] sm:$0xff]
    %v117 = vld [vmem:[#allocation7 + $0x68] sm:$0xff]
    %v118 = vld [vmem:[#allocation7 + $0x70] sm:$0xff]
    %v119 = vld [vmem:[#allocation7 + $0x78] sm:$0xff]
    %v120 = vld [vmem:[#allocation8] sm:$0xff]
    %v121 = vld [vmem:[#allocation8 + $0x8] sm:$0xff]
    %v122 = vld [vmem:[#allocation8 + $0x10] sm:$0xff]
    %v123 = vld [vmem:[#allocation8 + $0x18] sm:$0xff]
    %v124 = vld [vmem:[#allocation8 + $0x20] sm:$0xff]
    %v125 = vld [vmem:[#allocation8 + $0x28] sm:$0xff]
    %v126 = vld [vmem:[#allocation8 + $0x30] sm:$0xff]
    %v127 = vld [vmem:[#allocation8 + $0x38] sm:$0xff]
    %v128 = vld [vmem:[#allocation8 + $0x40] sm:$0xff]
    %v129 = vld [vmem:[#allocation8 + $0x48] sm:$0xff]
    %v130 = vld [vmem:[#allocation8 + $0x50] sm:$0xff]
    %v131 = vld [vmem:[#allocation8 + $0x58] sm:$0xff]
    %v132 = vld [vmem:[#allocation8 + $0x60] sm:$0xff]
    %v133 = vld [vmem:[#allocation8 + $0x68] sm:$0xff]
    %v134 = vld [vmem:[#allocation8 + $0x70] sm:$0xff]
    %v135 = vld [vmem:[#allocation8 + $0x78] sm:$0xff]
    %v136 = vld [vmem:[#allocation2] sm:$0xff]
    %v137 = vld [vmem:[#allocation2 + $0x8] sm:$0xff]
    %v138 = vld [vmem:[#allocation2 + $0x10] sm:$0xff]
    %v139 = vld [vmem:[#allocation2 + $0x18] sm:$0xff]
    %v140 = vld [vmem:[#allocation2 + $0x20] sm:$0xff]
    %v141 = vld [vmem:[#allocation2 + $0x28] sm:$0xff]
    %v142 = vld [vmem:[#allocation2 + $0x30] sm:$0xff]
    %v143 = vld [vmem:[#allocation2 + $0x38] sm:$0xff]
    %v144 = vld [vmem:[#allocation2 + $0x40] sm:$0xff]
    %v145 = vld [vmem:[#allocation2 + $0x48] sm:$0xff]
    %v146 = vld [vmem:[#allocation2 + $0x50] sm:$0xff]
    %v147 = vld [vmem:[#allocation2 + $0x58] sm:$0xff]
    %v148 = vld [vmem:[#allocation2 + $0x60] sm:$0xff]
    %v149 = vld [vmem:[#allocation2 + $0x68] sm:$0xff]
    %v150 = vld [vmem:[#allocation2 + $0x70] sm:$0xff]
    %v151 = vld [vmem:[#allocation2 + $0x78] sm:$0xff]
    %v152 = vld [vmem:[#allocation2 + $0x80] sm:$0xff]
    %v153 = vld [vmem:[#allocation2 + $0x88] sm:$0xff]
    %v154 = vld [vmem:[#allocation2 + $0x90] sm:$0xff]
    %v155 = vld [vmem:[#allocation2 + $0x98] sm:$0xff]
    %v156 = vld [vmem:[#allocation2 + $0xa0] sm:$0xff]
    %v157 = vld [vmem:[#allocation2 + $0xa8] sm:$0xff]
    %v158 = vld [vmem:[#allocation2 + $0xb0] sm:$0xff]
    %v159 = vld [vmem:[#allocation2 + $0xb8] sm:$0xff]
    %v160 = vld [vmem:[#allocation2 + $0xc0] sm:$0xff]
    %v161 = vld [vmem:[#allocation2 + $0xc8] sm:$0xff]
    %v162 = vld [vmem:[#allocation2 + $0xd0] sm:$0xff]
    %v163 = vld [vmem:[#allocation2 + $0xd8] sm:$0xff]
    %v164 = vld [vmem:[#allocation2 + $0xe0] sm:$0xff]
    %v165 = vld [vmem:[#allocation2 + $0xe8] sm:$0xff]
    %v166 = vld [vmem:[#allocation2 + $0xf0] sm:$0xff]
    %v167 = vld [vmem:[#allocation2 + $0xf8] sm:$0xff]
    %v168 = vlaneseq
    %v169 = vshrl.u32 %v168, 7
    %v170 = vsub.s32 0, %v169
    %v171 = vrot.slane %v87, %v170
    %v172 = vmul.f32 %v136, %v171
    %v173 = vmul.f32 %v137, %v171
    %v174 = vmul.f32 %v138, %v171
    %v175 = vmul.f32 %v139, %v171
    %v176 = vmul.f32 %v140, %v171
    %v177 = vmul.f32 %v141, %v171
    %v178 = vmul.f32 %v142, %v171
    %v179 = vmul.f32 %v143, %v171
    %v180 = vmul.f32 %v144, %v171
    %v181 = vmul.f32 %v145, %v171
    %v182 = vmul.f32 %v146, %v171
    %v183 = vmul.f32 %v147, %v171
    %v184 = vmul.f32 %v148, %v171
    %v185 = vmul.f32 %v149, %v171
    %v186 = vmul.f32 %v150, %v171
    %v187 = vmul.f32 %v151, %v171
    %v188 = vmul.f32 %v152, %v171
    %v189 = vmul.f32 %v153, %v171
    %v190 = vmul.f32 %v154, %v171
    %v191 = vmul.f32 %v155, %v171
    %v192 = vmul.f32 %v156, %v171
    %v193 = vmul.f32 %v157, %v171
    %v194 = vmul.f32 %v158, %v171
    %v195 = vmul.f32 %v159, %v171
    %v196 = vmul.f32 %v160, %v171
    %v197 = vmul.f32 %v161, %v171
    %v198 = vmul.f32 %v162, %v171
    %v199 = vmul.f32 %v163, %v171
    %v200 = vmul.f32 %v164, %v171
    %v201 = vmul.f32 %v165, %v171
    %v202 = vmul.f32 %v166, %v171
    %v203 = vmul.f32 %v167, %v171
    %204 = vadd.xlane.f32.xlu0 %v172
    %v205 = vpop.xlane.xlu0 %204
    %206 = vadd.xlane.f32.xlu0 %v173
    %v207 = vpop.xlane.xlu0 %206
    %208 = vadd.xlane.f32.xlu0 %v174
    %v209 = vpop.xlane.xlu0 %208
    %210 = vadd.xlane.f32.xlu0 %v175
    %v211 = vpop.xlane.xlu0 %210
    %212 = vadd.xlane.f32.xlu0 %v176
    %v213 = vpop.xlane.xlu0 %212
    %214 = vadd.xlane.f32.xlu0 %v177
    %v215 = vpop.xlane.xlu0 %214
    %216 = vadd.xlane.f32.xlu0 %v178
    %v217 = vpop.xlane.xlu0 %216
    %218 = vadd.xlane.f32.xlu0 %v179
    %v219 = vpop.xlane.xlu0 %218
    %220 = vadd.xlane.f32.xlu0 %v180
    %v221 = vpop.xlane.xlu0 %220
    %222 = vadd.xlane.f32.xlu0 %v181
    %v223 = vpop.xlane.xlu0 %222
    %224 = vadd.xlane.f32.xlu0 %v182
    %v225 = vpop.xlane.xlu0 %224
    %226 = vadd.xlane.f32.xlu0 %v183
    %v227 = vpop.xlane.xlu0 %226
    %228 = vadd.xlane.f32.xlu0 %v184
    %v229 = vpop.xlane.xlu0 %228
    %230 = vadd.xlane.f32.xlu0 %v185
    %v231 = vpop.xlane.xlu0 %230
    %232 = vadd.xlane.f32.xlu0 %v186
    %v233 = vpop.xlane.xlu0 %232
    %234 = vadd.xlane.f32.xlu0 %v187
    %v235 = vpop.xlane.xlu0 %234
    %236 = vadd.xlane.f32.xlu0 %v188
    %v237 = vpop.xlane.xlu0 %236
    %238 = vadd.xlane.f32.xlu0 %v189
    %v239 = vpop.xlane.xlu0 %238
    %240 = vadd.xlane.f32.xlu0 %v190
    %v241 = vpop.xlane.xlu0 %240
    %242 = vadd.xlane.f32.xlu0 %v191
    %v243 = vpop.xlane.xlu0 %242
    %244 = vadd.xlane.f32.xlu0 %v192
    %v245 = vpop.xlane.xlu0 %244
    %246 = vadd.xlane.f32.xlu0 %v193
    %v247 = vpop.xlane.xlu0 %246
    %248 = vadd.xlane.f32.xlu0 %v194
    %v249 = vpop.xlane.xlu0 %248
    %250 = vadd.xlane.f32.xlu0 %v195
    %v251 = vpop.xlane.xlu0 %250
    %252 = vadd.xlane.f32.xlu0 %v196
    %v253 = vpop.xlane.xlu0 %252
    %254 = vadd.xlane.f32.xlu0 %v197
    %v255 = vpop.xlane.xlu0 %254
    %256 = vadd.xlane.f32.xlu0 %v198
    %v257 = vpop.xlane.xlu0 %256
    %258 = vadd.xlane.f32.xlu0 %v199
    %v259 = vpop.xlane.xlu0 %258
    %260 = vadd.xlane.f32.xlu0 %v200
    %v261 = vpop.xlane.xlu0 %260
    %262 = vadd.xlane.f32.xlu0 %v201
    %v263 = vpop.xlane.xlu0 %262
    %264 = vadd.xlane.f32.xlu0 %v202
    %v265 = vpop.xlane.xlu0 %264
    %266 = vadd.xlane.f32.xlu0 %v203
    %v267 = vpop.xlane.xlu0 %266
    %v268 = vmax.f32 %v205, %v213
    %v269 = vmax.f32 %v207, %v215
    %v270 = vmax.f32 %v209, %v217
    %v271 = vmax.f32 %v211, %v219
    %v272 = vmax.f32 %v268, %v221
    %v273 = vmax.f32 %v269, %v223
    %v274 = vmax.f32 %v270, %v225
    %v275 = vmax.f32 %v271, %v227
    %v276 = vmax.f32 %v272, %v229
    %v277 = vmax.f32 %v273, %v231
    %v278 = vmax.f32 %v274, %v233
    %v279 = vmax.f32 %v275, %v235
    %v280 = vmax.f32 %v276, %v237
    %v281 = vmax.f32 %v277, %v239
    %v282 = vmax.f32 %v278, %v241
    %v283 = vmax.f32 %v279, %v243
    %v284 = vmax.f32 %v280, %v245
    %v285 = vmax.f32 %v281, %v247
    %v286 = vmax.f32 %v282, %v249
    %v287 = vmax.f32 %v283, %v251
    %v288 = vmax.f32 %v284, %v253
    %v289 = vmax.f32 %v285, %v255
    %v290 = vmax.f32 %v286, %v257
    %v291 = vmax.f32 %v287, %v259
    %v292 = vmax.f32 %v288, %v261
    %v293 = vmax.f32 %v289, %v263
    %v294 = vmax.f32 %v290, %v265
    %v295 = vmax.f32 %v291, %v267
    %v296 = vmax.f32 %v292, %v293
    %v297 = vmax.f32 %v294, %v295
    %v298 = vmax.f32 %v296, %v297
    %v299 = vrot.slane %v298, 4
    %v300 = vmax.f32 %v298, %v299
    %v301 = vrot.slane %v300, 2
    %v302 = vmax.f32 %v300, %v301
    %v303 = vrot.slane %v302, 1
    %v304 = vmax.f32 %v302, %v303
    %v305 = vsub.f32 %v205, %v304
    %v306 = vsub.f32 %v207, %v304
    %v307 = vsub.f32 %v209, %v304
    %v308 = vsub.f32 %v211, %v304
    %v309 = vsub.f32 %v213, %v304
    %v310 = vsub.f32 %v215, %v304
    %v311 = vsub.f32 %v217, %v304
    %v312 = vsub.f32 %v219, %v304
    %v313 = vsub.f32 %v221, %v304
    %v314 = vsub.f32 %v223, %v304
    %v315 = vsub.f32 %v225, %v304
    %v316 = vsub.f32 %v227, %v304
    %v317 = vsub.f32 %v229, %v304
    %v318 = vsub.f32 %v231, %v304
    %v319 = vsub.f32 %v233, %v304
    %v320 = vsub.f32 %v235, %v304
    %v321 = vsub.f32 %v237, %v304
    %v322 = vsub.f32 %v239, %v304
    %v323 = vsub.f32 %v241, %v304
    %v324 = vsub.f32 %v243, %v304
    %v325 = vsub.f32 %v245, %v304
    %v326 = vsub.f32 %v247, %v304
    %v327 = vsub.f32 %v249, %v304
    %v328 = vsub.f32 %v251, %v304
    %v329 = vsub.f32 %v253, %v304
    %v330 = vsub.f32 %v255, %v304
    %v331 = vsub.f32 %v257, %v304
    %v332 = vsub.f32 %v259, %v304
    %v333 = vsub.f32 %v261, %v304
    %v334 = vsub.f32 %v263, %v304
    %v335 = vsub.f32 %v265, %v304
    %v336 = vsub.f32 %v267, %v304
    %v337 = vmul.f32 %v305, 1.442695
    %v338 = vpow.pop %v337
    %v339 = vmul.f32 %v306, 1.442695
    %v340 = vpow.pop %v339
    %v341 = vmul.f32 %v307, 1.442695
    %v342 = vpow.pop %v341
    %v343 = vmul.f32 %v308, 1.442695
    %v344 = vpow.pop %v343
    %v345 = vmul.f32 %v309, 1.442695
    %v346 = vpow.pop %v345
    %v347 = vmul.f32 %v310, 1.442695
    %v348 = vpow.pop %v347
    %v349 = vmul.f32 %v311, 1.442695
    %v350 = vpow.pop %v349
    %v351 = vmul.f32 %v312, 1.442695
    %v352 = vpow.pop %v351
    %v353 = vmul.f32 %v313, 1.442695
    %v354 = vpow.pop %v353
    %v355 = vmul.f32 %v314, 1.442695
    %v356 = vpow.pop %v355
    %v357 = vmul.f32 %v315, 1.442695
    %v358 = vpow.pop %v357
    %v359 = vmul.f32 %v316, 1.442695
    %v360 = vpow.pop %v359
    %v361 = vmul.f32 %v317, 1.442695
    %v362 = vpow.pop %v361
    %v363 = vmul.f32 %v318, 1.442695
    %v364 = vpow.pop %v363
    %v365 = vmul.f32 %v319, 1.442695
    %v366 = vpow.pop %v365
    %v367 = vmul.f32 %v320, 1.442695
    %v368 = vpow.pop %v367
    %v369 = vmul.f32 %v321, 1.442695
    %v370 = vpow.pop %v369
    %v371 = vmul.f32 %v322, 1.442695
    %v372 = vpow.pop %v371
    %v373 = vmul.f32 %v323, 1.442695
    %v374 = vpow.pop %v373
    %v375 = vmul.f32 %v324, 1.442695
    %v376 = vpow.pop %v375
    %v377 = vmul.f32 %v325, 1.442695
    %v378 = vpow.pop %v377
    %v379 = vmul.f32 %v326, 1.442695
    %v380 = vpow.pop %v379
    %v381 = vmul.f32 %v327, 1.442695
    %v382 = vpow.pop %v381
    %v383 = vmul.f32 %v328, 1.442695
    %v384 = vpow.pop %v383
    %v385 = vmul.f32 %v329, 1.442695
    %v386 = vpow.pop %v385
    %v387 = vmul.f32 %v330, 1.442695
    %v388 = vpow.pop %v387
    %v389 = vmul.f32 %v331, 1.442695
    %v390 = vpow.pop %v389
    %v391 = vmul.f32 %v332, 1.442695
    %v392 = vpow.pop %v391
    %v393 = vmul.f32 %v333, 1.442695
    %v394 = vpow.pop %v393
    %v395 = vmul.f32 %v334, 1.442695
    %v396 = vpow.pop %v395
    %v397 = vmul.f32 %v335, 1.442695
    %v398 = vpow.pop %v397
    %v399 = vmul.f32 %v336, 1.442695
    %v400 = vpow.pop %v399
    %v401 = vadd.f32 %v338, %v340
    %v402 = vadd.f32 %v401, %v342
    %v403 = vadd.f32 %v402, %v344
    %v404 = vadd.f32 %v403, %v346
    %v405 = vadd.f32 %v404, %v348
    %v406 = vadd.f32 %v405, %v350
    %v407 = vadd.f32 %v406, %v352
    %v408 = vadd.f32 %v407, %v354
    %v409 = vadd.f32 %v408, %v356
    %v410 = vadd.f32 %v409, %v358
    %v411 = vadd.f32 %v410, %v360
    %v412 = vadd.f32 %v411, %v362
    %v413 = vadd.f32 %v412, %v364
    %v414 = vadd.f32 %v413, %v366
    %v415 = vadd.f32 %v414, %v368
    %v416 = vadd.f32 %v415, %v370
    %v417 = vadd.f32 %v416, %v372
    %v418 = vadd.f32 %v417, %v374
    %v419 = vadd.f32 %v418, %v376
    %v420 = vadd.f32 %v419, %v378
    %v421 = vadd.f32 %v420, %v380
    %v422 = vadd.f32 %v421, %v382
    %v423 = vadd.f32 %v422, %v384
    %v424 = vadd.f32 %v423, %v386
    %v425 = vadd.f32 %v424, %v388
    %v426 = vadd.f32 %v425, %v390
    %v427 = vadd.f32 %v426, %v392
    %v428 = vadd.f32 %v427, %v394
    %v429 = vadd.f32 %v428, %v396
    %v430 = vadd.f32 %v429, %v398
    %v431 = vadd.f32 %v430, %v400
    %v432 = vrot.slane %v431, 4
    %v433 = vadd.f32 %v431, %v432
    %v434 = vrot.slane %v433, 2
    %v435 = vadd.f32 %v433, %v434
    %v436 = vrot.slane %v435, 1
    %v437 = vadd.f32 %v435, %v436
    %v438 = vmul.f32 %v136, %v338
    %v439 = vmul.f32 %v137, %v340
    %v440 = vmul.f32 %v138, %v342
    %v441 = vmul.f32 %v139, %v344
    %v442 = vmul.f32 %v140, %v346
    %v443 = vmul.f32 %v141, %v348
    %v444 = vmul.f32 %v142, %v350
    %v445 = vmul.f32 %v143, %v352
    %v446 = vmul.f32 %v144, %v354
    %v447 = vmul.f32 %v145, %v356
    %v448 = vmul.f32 %v146, %v358
    %v449 = vmul.f32 %v147, %v360
    %v450 = vmul.f32 %v148, %v362
    %v451 = vmul.f32 %v149, %v364
    %v452 = vmul.f32 %v150, %v366
    %v453 = vmul.f32 %v151, %v368
    %v454 = vmul.f32 %v152, %v370
    %v455 = vmul.f32 %v153, %v372
    %v456 = vmul.f32 %v154, %v374
    %v457 = vmul.f32 %v155, %v376
    %v458 = vmul.f32 %v156, %v378
    %v459 = vmul.f32 %v157, %v380
    %v460 = vmul.f32 %v158, %v382
    %v461 = vmul.f32 %v159, %v384
    %v462 = vmul.f32 %v160, %v386
    %v463 = vmul.f32 %v161, %v388
    %v464 = vmul.f32 %v162, %v390
    %v465 = vmul.f32 %v163, %v392
    %v466 = vmul.f32 %v164, %v394
    %v467 = vmul.f32 %v165, %v396
    %v468 = vmul.f32 %v166, %v398
    %v469 = vmul.f32 %v167, %v400
    %v470 = vadd.f32 %v438, %v439
    %v471 = vadd.f32 %v470, %v440
    %v472 = vadd.f32 %v471, %v441
    %v473 = vadd.f32 %v472, %v442
    %v474 = vadd.f32 %v473, %v443
    %v475 = vadd.f32 %v474, %v444
    %v476 = vadd.f32 %v475, %v445
    %v477 = vadd.f32 %v476, %v446
    %v478 = vadd.f32 %v477, %v447
    %v479 = vadd.f32 %v478, %v448
    %v480 = vadd.f32 %v479, %v449
    %v481 = vadd.f32 %v480, %v450
    %v482 = vadd.f32 %v481, %v451
    %v483 = vadd.f32 %v482, %v452
    %v484 = vadd.f32 %v483, %v453
    %v485 = vadd.f32 %v484, %v454
    %v486 = vadd.f32 %v485, %v455
    %v487 = vadd.f32 %v486, %v456
    %v488 = vadd.f32 %v487, %v457
    %v489 = vadd.f32 %v488, %v458
    %v490 = vadd.f32 %v489, %v459
    %v491 = vadd.f32 %v490, %v460
    %v492 = vadd.f32 %v491, %v461
    %v493 = vadd.f32 %v492, %v462
    %v494 = vadd.f32 %v493, %v463
    %v495 = vadd.f32 %v494, %v464
    %v496 = vadd.f32 %v495, %v465
    %v497 = vadd.f32 %v496, %v466
    %v498 = vadd.f32 %v497, %v467
    %v499 = vadd.f32 %v498, %v468
    %v500 = vadd.f32 %v499, %v469
    %v501 = vrot.slane %v500, 4
    %v502 = vadd.f32 %v500, %v501
    %v503 = vrot.slane %v502, 2
    %v504 = vadd.f32 %v502, %v503
    %v505 = vrot.slane %v504, 1
    %v506 = vadd.f32 %v504, %v505
    %v507 = vrcp.pop %v437
    %v508 = vmul.f32 %v506, %v507
    %v510 = vrot.slane %v87, 1
    %512 = vmatprep.subr.mxu0 0.0
    %513 = vmatpush1.msra.mxu0 %v88
    %514 = vmatprep.subr.mxu0 0.0
    %515 = vmatpush1.msra.mxu0 %v89
    %516 = vmatprep.subr.mxu0 0.0
    %517 = vmatpush1.msra.mxu0 %v90
    %518 = vmatprep.subr.mxu0 0.0
    %519 = vmatpush1.msra.mxu0 %v91
    %520 = vmatprep.subr.mxu0 0.0
    %521 = vmatpush1.msra.mxu0 %v92
    %522 = vmatprep.subr.mxu0 0.0
    %523 = vmatpush1.msra.mxu0 %v93
    %524 = vmatprep.subr.mxu0 0.0
    %525 = vmatpush1.msra.mxu0 %v94
    %526 = vmatprep.subr.mxu0 0.0
    %527 = vmatpush1.msra.mxu0 %v95
    %528 = vmatprep.subr.mxu0 0.0
    %529 = vmatpush1.msra.mxu0 %v96
    %530 = vmatprep.subr.mxu0 0.0
    %531 = vmatpush1.msra.mxu0 %v97
    %532 = vmatprep.subr.mxu0 0.0
    %533 = vmatpush1.msra.mxu0 %v98
    %534 = vmatprep.subr.mxu0 0.0
    %535 = vmatpush1.msra.mxu0 %v99
    %536 = vmatprep.subr.mxu0 0.0
    %537 = vmatpush1.msra.mxu0 %v100
    %538 = vmatprep.subr.mxu0 0.0
    %539 = vmatpush1.msra.mxu0 %v101
    %540 = vmatprep.subr.mxu0 0.0
    %541 = vmatpush1.msra.mxu0 %v102
    %542 = vmatprep.subr.mxu0 0.0
    %543 = vmatpush1.msra.mxu0 %v103
    %544 = vmatprep.subr.mxu0 0.0
    %545 = vmatpush1.msra.mxu0 0.0
    %546 = vmatprep.subr.mxu0 0.0
    %547 = vmatpush1.msra.mxu0 0.0
    %548 = vmatprep.subr.mxu0 0.0
    %549 = vmatpush1.msra.mxu0 0.0
    %550 = vmatprep.subr.mxu0 0.0
    %551 = vmatpush1.msra.mxu0 0.0
    %552 = vmatprep.subr.mxu0 0.0
    %553 = vmatpush1.msra.mxu0 0.0
    %554 = vmatprep.subr.mxu0 0.0
    %555 = vmatpush1.msra.mxu0 0.0
    %556 = vmatprep.subr.mxu0 0.0
    %557 = vmatpush1.msra.mxu0 0.0
    %558 = vmatprep.subr.mxu0 0.0
    %559 = vmatpush1.msra.mxu0 0.0
    %560 = vmatprep.subr.mxu0 0.0
    %561 = vmatpush1.msra.mxu0 0.0
    %562 = vmatprep.subr.mxu0 0.0
    %563 = vmatpush1.msra.mxu0 0.0
    %564 = vmatprep.subr.mxu0 0.0
    %565 = vmatpush1.msra.mxu0 0.0
    %566 = vmatprep.subr.mxu0 0.0
    %567 = vmatpush1.msra.mxu0 0.0
    %568 = vmatprep.subr.mxu0 0.0
    %569 = vmatpush1.msra.mxu0 0.0
    %570 = vmatprep.subr.mxu0 0.0
    %571 = vmatpush1.msra.mxu0 0.0
    %572 = vmatprep.subr.mxu0 0.0
    %573 = vmatpush1.msra.mxu0 0.0
    %574 = vmatprep.subr.mxu0 0.0
    %575 = vmatpush1.msra.mxu0 0.0
    %576 = vmatprep.mubr.f32.mxu0 0.0
    %577 = vmatmul.mubr.f32.gmra.mrb[0].mxu0 %v508
    %v578 = vpop.f32.mrb[0].mxu0
    %v579 = vadd.f32 %v510, %v578
    %v580 = vpop.f32.mrb[0].mxu0
    %581 = vdwg.mxu0
    %vm582 = vcmask 1040384
    %v583 = vsel %vm582, %v579, 0.0
    %584 = vadd.xlane.f32.xlu0 %v583
    %v585 = vpop.xlane.xlu0 %584
    %v586 = vrcp.pop 128.0
    %v587 = vmul.f32 %v585, %v586
    %v588 = vsub.f32 %v579, %v587
    %v589 = vmul.f32 %v588, %v588
    %v590 = vsel %vm582, %v589, 0.0
    %591 = vadd.xlane.f32.xlu0 %v590
    %v592 = vpop.xlane.xlu0 %591
    %v593 = vmul.f32 %v592, %v586
    %v594 = vadd.f32 %v593, 1e-05
    %v595 = vrsqrt.pop %v594
    %v596 = vmul.f32 %v588, %v595
    %v597 = vrot.slane %v87, 2
    %v599 = vmul.f32 %v596, %v597
    %v600 = vrot.slane %v87, 3
    %v602 = vadd.f32 %v599, %v600
    %v603 = vxor.u32 %v602, 2147483648
    %v604 = vmul.f32 %v603, 1.442695
    %v605 = vpow.pop %v604
    %v606 = vadd.f32 %v605, 1.0
    %v607 = vrcp.pop %v606
    %v608 = vmul.f32 1.0, %v607
    %v609 = vlaneseq
    %v610 = vshrl.u32 %v609, 7
    %v611 = vsub.s32 0, %v610
    %v612 = vrot.slane %v608, %v611
    %v613 = vmul.f32 %v136, %v612
    %v614 = vmul.f32 %v137, %v612
    %v615 = vmul.f32 %v138, %v612
    %v616 = vmul.f32 %v139, %v612
    %v617 = vmul.f32 %v140, %v612
    %v618 = vmul.f32 %v141, %v612
    %v619 = vmul.f32 %v142, %v612
    %v620 = vmul.f32 %v143, %v612
    %v621 = vmul.f32 %v144, %v612
    %v622 = vmul.f32 %v145, %v612
    %v623 = vmul.f32 %v146, %v612
    %v624 = vmul.f32 %v147, %v612
    %v625 = vmul.f32 %v148, %v612
    %v626 = vmul.f32 %v149, %v612
    %v627 = vmul.f32 %v150, %v612
    %v628 = vmul.f32 %v151, %v612
    %v629 = vmul.f32 %v152, %v612
    %v630 = vmul.f32 %v153, %v612
    %v631 = vmul.f32 %v154, %v612
    %v632 = vmul.f32 %v155, %v612
    %v633 = vmul.f32 %v156, %v612
    %v634 = vmul.f32 %v157, %v612
    %v635 = vmul.f32 %v158, %v612
    %v636 = vmul.f32 %v159, %v612
    %v637 = vmul.f32 %v160, %v612
    %v638 = vmul.f32 %v161, %v612
    %v639 = vmul.f32 %v162, %v612
    %v640 = vmul.f32 %v163, %v612
    %v641 = vmul.f32 %v164, %v612
    %v642 = vmul.f32 %v165, %v612
    %v643 = vmul.f32 %v166, %v612
    %v644 = vmul.f32 %v167, %v612
    %v645 = vadd.f32 %v613, %v614
    %v646 = vadd.f32 %v645, %v615
    %v647 = vadd.f32 %v646, %v616
    %v648 = vadd.f32 %v647, %v617
    %v649 = vadd.f32 %v648, %v618
    %v650 = vadd.f32 %v649, %v619
    %v651 = vadd.f32 %v650, %v620
    %v652 = vadd.f32 %v651, %v621
    %v653 = vadd.f32 %v652, %v622
    %v654 = vadd.f32 %v653, %v623
    %v655 = vadd.f32 %v654, %v624
    %v656 = vadd.f32 %v655, %v625
    %v657 = vadd.f32 %v656, %v626
    %v658 = vadd.f32 %v657, %v627
    %v659 = vadd.f32 %v658, %v628
    %v660 = vadd.f32 %v659, %v629
    %v661 = vadd.f32 %v660, %v630
    %v662 = vadd.f32 %v661, %v631
    %v663 = vadd.f32 %v662, %v632
    %v664 = vadd.f32 %v663, %v633
    %v665 = vadd.f32 %v664, %v634
    %v666 = vadd.f32 %v665, %v635
    %v667 = vadd.f32 %v666, %v636
    %v668 = vadd.f32 %v667, %v637
    %v669 = vadd.f32 %v668, %v638
    %v670 = vadd.f32 %v669, %v639
    %v671 = vadd.f32 %v670, %v640
    %v672 = vadd.f32 %v671, %v641
    %v673 = vadd.f32 %v672, %v642
    %v674 = vadd.f32 %v673, %v643
    %v675 = vadd.f32 %v674, %v644
    %v676 = vrot.slane %v675, 4
    %v677 = vadd.f32 %v675, %v676
    %v678 = vrot.slane %v677, 2
    %v679 = vadd.f32 %v677, %v678
    %v680 = vrot.slane %v679, 1
    %v681 = vadd.f32 %v679, %v680
    %v682 = vrcp.pop 256.0
    %v683 = vmul.f32 %v681, %v682
    %v684 = vrot.slane %v87, 4
    %686 = vmatprep.subr.mxu0 0.0
    %687 = vmatpush1.msra.mxu0 %v104
    %688 = vmatprep.subr.mxu0 0.0
    %689 = vmatpush1.msra.mxu0 %v105
    %690 = vmatprep.subr.mxu0 0.0
    %691 = vmatpush1.msra.mxu0 %v106
    %692 = vmatprep.subr.mxu0 0.0
    %693 = vmatpush1.msra.mxu0 %v107
    %694 = vmatprep.subr.mxu0 0.0
    %695 = vmatpush1.msra.mxu0 %v108
    %696 = vmatprep.subr.mxu0 0.0
    %697 = vmatpush1.msra.mxu0 %v109
    %698 = vmatprep.subr.mxu0 0.0
    %699 = vmatpush1.msra.mxu0 %v110
    %700 = vmatprep.subr.mxu0 0.0
    %701 = vmatpush1.msra.mxu0 %v111
    %702 = vmatprep.subr.mxu0 0.0
    %703 = vmatpush1.msra.mxu0 %v112
    %704 = vmatprep.subr.mxu0 0.0
    %705 = vmatpush1.msra.mxu0 %v113
    %706 = vmatprep.subr.mxu0 0.0
    %707 = vmatpush1.msra.mxu0 %v114
    %708 = vmatprep.subr.mxu0 0.0
    %709 = vmatpush1.msra.mxu0 %v115
    %710 = vmatprep.subr.mxu0 0.0
    %711 = vmatpush1.msra.mxu0 %v116
    %712 = vmatprep.subr.mxu0 0.0
    %713 = vmatpush1.msra.mxu0 %v117
    %714 = vmatprep.subr.mxu0 0.0
    %715 = vmatpush1.msra.mxu0 %v118
    %716 = vmatprep.subr.mxu0 0.0
    %717 = vmatpush1.msra.mxu0 %v119
    %718 = vmatprep.subr.mxu0 0.0
    %719 = vmatpush1.msra.mxu0 0.0
    %720 = vmatprep.subr.mxu0 0.0
    %721 = vmatpush1.msra.mxu0 0.0
    %722 = vmatprep.subr.mxu0 0.0
    %723 = vmatpush1.msra.mxu0 0.0
    %724 = vmatprep.subr.mxu0 0.0
    %725 = vmatpush1.msra.mxu0 0.0
    %726 = vmatprep.subr.mxu0 0.0
    %727 = vmatpush1.msra.mxu0 0.0
    %728 = vmatprep.subr.mxu0 0.0
    %729 = vmatpush1.msra.mxu0 0.0
    %730 = vmatprep.subr.mxu0 0.0
    %731 = vmatpush1.msra.mxu0 0.0
    %732 = vmatprep.subr.mxu0 0.0
    %733 = vmatpush1.msra.mxu0 0.0
    %734 = vmatprep.subr.mxu0 0.0
    %735 = vmatpush1.msra.mxu0 0.0
    %736 = vmatprep.subr.mxu0 0.0
    %737 = vmatpush1.msra.mxu0 0.0
    %738 = vmatprep.subr.mxu0 0.0
    %739 = vmatpush1.msra.mxu0 0.0
    %740 = vmatprep.subr.mxu0 0.0
    %741 = vmatpush1.msra.mxu0 0.0
    %742 = vmatprep.subr.mxu0 0.0
    %743 = vmatpush1.msra.mxu0 0.0
    %744 = vmatprep.subr.mxu0 0.0
    %745 = vmatpush1.msra.mxu0 0.0
    %746 = vmatprep.subr.mxu0 0.0
    %747 = vmatpush1.msra.mxu0 0.0
    %748 = vmatprep.subr.mxu0 0.0
    %749 = vmatpush1.msra.mxu0 0.0
    %750 = vmatprep.mubr.f32.mxu0 0.0
    %751 = vmatmul.mubr.f32.gmra.mrb[0].mxu0 %v683
    %v752 = vpop.f32.mrb[0].mxu0
    %v753 = vadd.f32 %v684, %v752
    %v754 = vpop.f32.mrb[0].mxu0
    %755 = vdwg.mxu0
    %756 = vmatprep.subr.mxu0 0.0
    %757 = vmatpush1.msra.mxu0 %v120
    %758 = vmatprep.subr.mxu0 0.0
    %759 = vmatpush1.msra.mxu0 %v121
    %760 = vmatprep.subr.mxu0 0.0
    %761 = vmatpush1.msra.mxu0 %v122
    %762 = vmatprep.subr.mxu0 0.0
    %763 = vmatpush1.msra.mxu0 %v123
    %764 = vmatprep.subr.mxu0 0.0
    %765 = vmatpush1.msra.mxu0 %v124
    %766 = vmatprep.subr.mxu0 0.0
    %767 = vmatpush1.msra.mxu0 %v125
    %768 = vmatprep.subr.mxu0 0.0
    %769 = vmatpush1.msra.mxu0 %v126
    %770 = vmatprep.subr.mxu0 0.0
    %771 = vmatpush1.msra.mxu0 %v127
    %772 = vmatprep.subr.mxu0 0.0
    %773 = vmatpush1.msra.mxu0 %v128
    %774 = vmatprep.subr.mxu0 0.0
    %775 = vmatpush1.msra.mxu0 %v129
    %776 = vmatprep.subr.mxu0 0.0
    %777 = vmatpush1.msra.mxu0 %v130
    %778 = vmatprep.subr.mxu0 0.0
    %779 = vmatpush1.msra.mxu0 %v131
    %780 = vmatprep.subr.mxu0 0.0
    %781 = vmatpush1.msra.mxu0 %v132
    %782 = vmatprep.subr.mxu0 0.0
    %783 = vmatpush1.msra.mxu0 %v133
    %784 = vmatprep.subr.mxu0 0.0
    %785 = vmatpush1.msra.mxu0 %v134
    %786 = vmatprep.subr.mxu0 0.0
    %787 = vmatpush1.msra.mxu0 %v135
    %788 = vmatprep.subr.mxu0 0.0
    %789 = vmatpush1.msra.mxu0 0.0
    %790 = vmatprep.subr.mxu0 0.0
    %791 = vmatpush1.msra.mxu0 0.0
    %792 = vmatprep.subr.mxu0 0.0
    %793 = vmatpush1.msra.mxu0 0.0
    %794 = vmatprep.subr.mxu0 0.0
    %795 = vmatpush1.msra.mxu0 0.0
    %796 = vmatprep.subr.mxu0 0.0
    %797 = vmatpush1.msra.mxu0 0.0
    %798 = vmatprep.subr.mxu0 0.0
    %799 = vmatpush1.msra.mxu0 0.0
    %800 = vmatprep.subr.mxu0 0.0
    %801 = vmatpush1.msra.mxu0 0.0
    %802 = vmatprep.subr.mxu0 0.0
    %803 = vmatpush1.msra.mxu0 0.0
    %804 = vmatprep.subr.mxu0 0.0
    %805 = vmatpush1.msra.mxu0 0.0
    %806 = vmatprep.subr.mxu0 0.0
    %807 = vmatpush1.msra.mxu0 0.0
    %808 = vmatprep.subr.mxu0 0.0
    %809 = vmatpush1.msra.mxu0 0.0
    %810 = vmatprep.subr.mxu0 0.0
    %811 = vmatpush1.msra.mxu0 0.0
    %812 = vmatprep.subr.mxu0 0.0
    %813 = vmatpush1.msra.mxu0 0.0
    %814 = vmatprep.subr.mxu0 0.0
    %815 = vmatpush1.msra.mxu0 0.0
    %816 = vmatprep.subr.mxu0 0.0
    %817 = vmatpush1.msra.mxu0 0.0
    %818 = vmatprep.subr.mxu0 0.0
    %819 = vmatpush1.msra.mxu0 0.0
    %820 = vmatprep.mubr.f32.mxu0 0.0
    %821 = vmatmul.mubr.f32.gmra.mrb[0].mxu0 %v753
    %v822 = vpop.f32.mrb[0].mxu0
    %v823 = vadd.f32 0.0, %v822
    %v824 = vpop.f32.mrb[0].mxu0
    %825 = vdwg.mxu0
    %v826 = vrot.slane %v87, 5
    %v828 = vmul.f32 %v753, %v826
    %v829 = vsel %vm582, %v828, 0.0
    %830 = vadd.xlane.f32.xlu0 %v829
    %v831 = vpop.xlane.xlu0 %830
    %v832 = vlaneseq
    %v833 = vshrl.u32 %v832, 7
    %v834 = vsub.s32 0, %v833
    %v835 = vrot.slane %v823, %v834
    %v836 = vmul.f32 %v613, %v835
    %v837 = vmul.f32 %v614, %v835
    %v838 = vmul.f32 %v615, %v835
    %v839 = vmul.f32 %v616, %v835
    %v840 = vmul.f32 %v617, %v835
    %v841 = vmul.f32 %v618, %v835
    %v842 = vmul.f32 %v619, %v835
    %v843 = vmul.f32 %v620, %v835
    %v844 = vmul.f32 %v621, %v835
    %v845 = vmul.f32 %v622, %v835
    %v846 = vmul.f32 %v623, %v835
    %v847 = vmul.f32 %v624, %v835
    %v848 = vmul.f32 %v625, %v835
    %v849 = vmul.f32 %v626, %v835
    %v850 = vmul.f32 %v627, %v835
    %v851 = vmul.f32 %v628, %v835
    %v852 = vmul.f32 %v629, %v835
    %v853 = vmul.f32 %v630, %v835
    %v854 = vmul.f32 %v631, %v835
    %v855 = vmul.f32 %v632, %v835
    %v856 = vmul.f32 %v633, %v835
    %v857 = vmul.f32 %v634, %v835
    %v858 = vmul.f32 %v635, %v835
    %v859 = vmul.f32 %v636, %v835
    %v860 = vmul.f32 %v637, %v835
    %v861 = vmul.f32 %v638, %v835
    %v862 = vmul.f32 %v639, %v835
    %v863 = vmul.f32 %v640, %v835
    %v864 = vmul.f32 %v641, %v835
    %v865 = vmul.f32 %v642, %v835
    %v866 = vmul.f32 %v643, %v835
    %v867 = vmul.f32 %v644, %v835
    %868 = vadd.xlane.f32.xlu0 %v836
    %v869 = vpop.xlane.xlu0 %868
    %870 = vadd.xlane.f32.xlu0 %v837
    %v871 = vpop.xlane.xlu0 %870
    %872 = vadd.xlane.f32.xlu0 %v838
    %v873 = vpop.xlane.xlu0 %872
    %874 = vadd.xlane.f32.xlu0 %v839
    %v875 = vpop.xlane.xlu0 %874
    %876 = vadd.xlane.f32.xlu0 %v840
    %v877 = vpop.xlane.xlu0 %876
    %878 = vadd.xlane.f32.xlu0 %v841
    %v879 = vpop.xlane.xlu0 %878
    %880 = vadd.xlane.f32.xlu0 %v842
    %v881 = vpop.xlane.xlu0 %880
    %882 = vadd.xlane.f32.xlu0 %v843
    %v883 = vpop.xlane.xlu0 %882
    %884 = vadd.xlane.f32.xlu0 %v844
    %v885 = vpop.xlane.xlu0 %884
    %886 = vadd.xlane.f32.xlu0 %v845
    %v887 = vpop.xlane.xlu0 %886
    %888 = vadd.xlane.f32.xlu0 %v846
    %v889 = vpop.xlane.xlu0 %888
    %890 = vadd.xlane.f32.xlu0 %v847
    %v891 = vpop.xlane.xlu0 %890
    %892 = vadd.xlane.f32.xlu0 %v848
    %v893 = vpop.xlane.xlu0 %892
    %894 = vadd.xlane.f32.xlu0 %v849
    %v895 = vpop.xlane.xlu0 %894
    %896 = vadd.xlane.f32.xlu0 %v850
    %v897 = vpop.xlane.xlu0 %896
    %898 = vadd.xlane.f32.xlu0 %v851
    %v899 = vpop.xlane.xlu0 %898
    %900 = vadd.xlane.f32.xlu0 %v852
    %v901 = vpop.xlane.xlu0 %900
    %902 = vadd.xlane.f32.xlu0 %v853
    %v903 = vpop.xlane.xlu0 %902
    %904 = vadd.xlane.f32.xlu0 %v854
    %v905 = vpop.xlane.xlu0 %904
    %906 = vadd.xlane.f32.xlu0 %v855
    %v907 = vpop.xlane.xlu0 %906
    %908 = vadd.xlane.f32.xlu0 %v856
    %v909 = vpop.xlane.xlu0 %908
    %910 = vadd.xlane.f32.xlu0 %v857
    %v911 = vpop.xlane.xlu0 %910
    %912 = vadd.xlane.f32.xlu0 %v858
    %v913 = vpop.xlane.xlu0 %912
    %914 = vadd.xlane.f32.xlu0 %v859
    %v915 = vpop.xlane.xlu0 %914
    %916 = vadd.xlane.f32.xlu0 %v860
    %v917 = vpop.xlane.xlu0 %916
    %918 = vadd.xlane.f32.xlu0 %v861
    %v919 = vpop.xlane.xlu0 %918
    %920 = vadd.xlane.f32.xlu0 %v862
    %v921 = vpop.xlane.xlu0 %920
    %922 = vadd.xlane.f32.xlu0 %v863
    %v923 = vpop.xlane.xlu0 %922
    %924 = vadd.xlane.f32.xlu0 %v864
    %v925 = vpop.xlane.xlu0 %924
    %926 = vadd.xlane.f32.xlu0 %v865
    %v927 = vpop.xlane.xlu0 %926
    %928 = vadd.xlane.f32.xlu0 %v866
    %v929 = vpop.xlane.xlu0 %928
    %930 = vadd.xlane.f32.xlu0 %v867
    %v931 = vpop.xlane.xlu0 %930
    %v932 = vlaneseq
    %v933 = vshrl.u32 %v932, 7
    %v934 = vsub.s32 0, %v933
    %v935 = vrot.slane %v831, %v934
    %v936 = vadd.f32 %v869, %v935
    %v937 = vadd.f32 %v871, %v935
    %v938 = vadd.f32 %v873, %v935
    %v939 = vadd.f32 %v875, %v935
    %v940 = vadd.f32 %v877, %v935
    %v941 = vadd.f32 %v879, %v935
    %v942 = vadd.f32 %v881, %v935
    %v943 = vadd.f32 %v883, %v935
    %v944 = vadd.f32 %v885, %v935
    %v945 = vadd.f32 %v887, %v935
    %v946 = vadd.f32 %v889, %v935
    %v947 = vadd.f32 %v891, %v935
    %v948 = vadd.f32 %v893, %v935
    %v949 = vadd.f32 %v895, %v935
    %v950 = vadd.f32 %v897, %v935
    %v951 = vadd.f32 %v899, %v935
    %v952 = vadd.f32 %v901, %v935
    %v953 = vadd.f32 %v903, %v935
    %v954 = vadd.f32 %v905, %v935
    %v955 = vadd.f32 %v907, %v935
    %v956 = vadd.f32 %v909, %v935
    %v957 = vadd.f32 %v911, %v935
    %v958 = vadd.f32 %v913, %v935
    %v959 = vadd.f32 %v915, %v935
    %v960 = vadd.f32 %v917, %v935
    %v961 = vadd.f32 %v919, %v935
    %v962 = vadd.f32 %v921, %v935
    %v963 = vadd.f32 %v923, %v935
    %v964 = vadd.f32 %v925, %v935
    %v965 = vadd.f32 %v927, %v935
    %v966 = vadd.f32 %v929, %v935
    %v967 = vadd.f32 %v931, %v935
    %v968 = vxor.u32 %v936, 2147483648
    %v969 = vxor.u32 %v937, 2147483648
    %v970 = vxor.u32 %v938, 2147483648
    %v971 = vxor.u32 %v939, 2147483648
    %v972 = vxor.u32 %v940, 2147483648
    %v973 = vxor.u32 %v941, 2147483648
    %v974 = vxor.u32 %v942, 2147483648
    %v975 = vxor.u32 %v943, 2147483648
    %v976 = vxor.u32 %v944, 2147483648
    %v977 = vxor.u32 %v945, 2147483648
    %v978 = vxor.u32 %v946, 2147483648
    %v979 = vxor.u32 %v947, 2147483648
    %v980 = vxor.u32 %v948, 2147483648
    %v981 = vxor.u32 %v949, 2147483648
    %v982 = vxor.u32 %v950, 2147483648
    %v983 = vxor.u32 %v951, 2147483648
    %v984 = vxor.u32 %v952, 2147483648
    %v985 = vxor.u32 %v953, 2147483648
    %v986 = vxor.u32 %v954, 2147483648
    %v987 = vxor.u32 %v955, 2147483648
    %v988 = vxor.u32 %v956, 2147483648
    %v989 = vxor.u32 %v957, 2147483648
    %v990 = vxor.u32 %v958, 2147483648
    %v991 = vxor.u32 %v959, 2147483648
    %v992 = vxor.u32 %v960, 2147483648
    %v993 = vxor.u32 %v961, 2147483648
    %v994 = vxor.u32 %v962, 2147483648
    %v995 = vxor.u32 %v963, 2147483648
    %v996 = vxor.u32 %v964, 2147483648
    %v997 = vxor.u32 %v965, 2147483648
    %v998 = vxor.u32 %v966, 2147483648
    %v999 = vxor.u32 %v967, 2147483648
    %v1000 = vmul.f32 %v968, 1.442695
    %v1001 = vpow.pop %v1000
    %v1002 = vmul.f32 %v969, 1.442695
    %v1003 = vpow.pop %v1002
    %v1004 = vmul.f32 %v970, 1.442695
    %v1005 = vpow.pop %v1004
    %v1006 = vmul.f32 %v971, 1.442695
    %v1007 = vpow.pop %v1006
    %v1008 = vmul.f32 %v972, 1.442695
    %v1009 = vpow.pop %v1008
    %v1010 = vmul.f32 %v973, 1.442695
    %v1011 = vpow.pop %v1010
    %v1012 = vmul.f32 %v974, 1.442695
    %v1013 = vpow.pop %v1012
    %v1014 = vmul.f32 %v975, 1.442695
    %v1015 = vpow.pop %v1014
    %v1016 = vmul.f32 %v976, 1.442695
    %v1017 = vpow.pop %v1016
    %v1018 = vmul.f32 %v977, 1.442695
    %v1019 = vpow.pop %v1018
    %v1020 = vmul.f32 %v978, 1.442695
    %v1021 = vpow.pop %v1020
    %v1022 = vmul.f32 %v979, 1.442695
    %v1023 = vpow.pop %v1022
    %v1024 = vmul.f32 %v980, 1.442695
    %v1025 = vpow.pop %v1024
    %v1026 = vmul.f32 %v981, 1.442695
    %v1027 = vpow.pop %v1026
    %v1028 = vmul.f32 %v982, 1.442695
    %v1029 = vpow.pop %v1028
    %v1030 = vmul.f32 %v983, 1.442695
    %v1031 = vpow.pop %v1030
    %v1032 = vmul.f32 %v984, 1.442695
    %v1033 = vpow.pop %v1032
    %v1034 = vmul.f32 %v985, 1.442695
    %v1035 = vpow.pop %v1034
    %v1036 = vmul.f32 %v986, 1.442695
    %v1037 = vpow.pop %v1036
    %v1038 = vmul.f32 %v987, 1.442695
    %v1039 = vpow.pop %v1038
    %v1040 = vmul.f32 %v988, 1.442695
    %v1041 = vpow.pop %v1040
    %v1042 = vmul.f32 %v989, 1.442695
    %v1043 = vpow.pop %v1042
    %v1044 = vmul.f32 %v990, 1.442695
    %v1045 = vpow.pop %v1044
    %v1046 = vmul.f32 %v991, 1.442695
    %v1047 = vpow.pop %v1046
    %v1048 = vmul.f32 %v992, 1.442695
    %v1049 = vpow.pop %v1048
    %v1050 = vmul.f32 %v993, 1.442695
    %v1051 = vpow.pop %v1050
    %v1052 = vmul.f32 %v994, 1.442695
    %v1053 = vpow.pop %v1052
    %v1054 = vmul.f32 %v995, 1.442695
    %v1055 = vpow.pop %v1054
    %v1056 = vmul.f32 %v996, 1.442695
    %v1057 = vpow.pop %v1056
    %v1058 = vmul.f32 %v997, 1.442695
    %v1059 = vpow.pop %v1058
    %v1060 = vmul.f32 %v998, 1.442695
    %v1061 = vpow.pop %v1060
    %v1062 = vmul.f32 %v999, 1.442695
    %v1063 = vpow.pop %v1062
    %v1064 = vadd.f32 %v1001, 1.0
    %v1065 = vadd.f32 %v1003, 1.0
    %v1066 = vadd.f32 %v1005, 1.0
    %v1067 = vadd.f32 %v1007, 1.0
    %v1068 = vadd.f32 %v1009, 1.0
    %v1069 = vadd.f32 %v1011, 1.0
    %v1070 = vadd.f32 %v1013, 1.0
    %v1071 = vadd.f32 %v1015, 1.0
    %v1072 = vadd.f32 %v1017, 1.0
    %v1073 = vadd.f32 %v1019, 1.0
    %v1074 = vadd.f32 %v1021, 1.0
    %v1075 = vadd.f32 %v1023, 1.0
    %v1076 = vadd.f32 %v1025, 1.0
    %v1077 = vadd.f32 %v1027, 1.0
    %v1078 = vadd.f32 %v1029, 1.0
    %v1079 = vadd.f32 %v1031, 1.0
    %v1080 = vadd.f32 %v1033, 1.0
    %v1081 = vadd.f32 %v1035, 1.0
    %v1082 = vadd.f32 %v1037, 1.0
    %v1083 = vadd.f32 %v1039, 1.0
    %v1084 = vadd.f32 %v1041, 1.0
    %v1085 = vadd.f32 %v1043, 1.0
    %v1086 = vadd.f32 %v1045, 1.0
    %v1087 = vadd.f32 %v1047, 1.0
    %v1088 = vadd.f32 %v1049, 1.0
    %v1089 = vadd.f32 %v1051, 1.0
    %v1090 = vadd.f32 %v1053, 1.0
    %v1091 = vadd.f32 %v1055, 1.0
    %v1092 = vadd.f32 %v1057, 1.0
    %v1093 = vadd.f32 %v1059, 1.0
    %v1094 = vadd.f32 %v1061, 1.0
    %v1095 = vadd.f32 %v1063, 1.0
    %v1096 = vrcp.pop %v1064
    %v1097 = vmul.f32 1.0, %v1096
    %v1098 = vrcp.pop %v1065
    %v1099 = vmul.f32 1.0, %v1098
    %v1100 = vrcp.pop %v1066
    %v1101 = vmul.f32 1.0, %v1100
    %v1102 = vrcp.pop %v1067
    %v1103 = vmul.f32 1.0, %v1102
    %v1104 = vrcp.pop %v1068
    %v1105 = vmul.f32 1.0, %v1104
    %v1106 = vrcp.pop %v1069
    %v1107 = vmul.f32 1.0, %v1106
    %v1108 = vrcp.pop %v1070
    %v1109 = vmul.f32 1.0, %v1108
    %v1110 = vrcp.pop %v1071
    %v1111 = vmul.f32 1.0, %v1110
    %v1112 = vrcp.pop %v1072
    %v1113 = vmul.f32 1.0, %v1112
    %v1114 = vrcp.pop %v1073
    %v1115 = vmul.f32 1.0, %v1114
    %v1116 = vrcp.pop %v1074
    %v1117 = vmul.f32 1.0, %v1116
    %v1118 = vrcp.pop %v1075
    %v1119 = vmul.f32 1.0, %v1118
    %v1120 = vrcp.pop %v1076
    %v1121 = vmul.f32 1.0, %v1120
    %v1122 = vrcp.pop %v1077
    %v1123 = vmul.f32 1.0, %v1122
    %v1124 = vrcp.pop %v1078
    %v1125 = vmul.f32 1.0, %v1124
    %v1126 = vrcp.pop %v1079
    %v1127 = vmul.f32 1.0, %v1126
    %v1128 = vrcp.pop %v1080
    %v1129 = vmul.f32 1.0, %v1128
    %v1130 = vrcp.pop %v1081
    %v1131 = vmul.f32 1.0, %v1130
    %v1132 = vrcp.pop %v1082
    %v1133 = vmul.f32 1.0, %v1132
    %v1134 = vrcp.pop %v1083
    %v1135 = vmul.f32 1.0, %v1134
    %v1136 = vrcp.pop %v1084
    %v1137 = vmul.f32 1.0, %v1136
    %v1138 = vrcp.pop %v1085
    %v1139 = vmul.f32 1.0, %v1138
    %v1140 = vrcp.pop %v1086
    %v1141 = vmul.f32 1.0, %v1140
    %v1142 = vrcp.pop %v1087
    %v1143 = vmul.f32 1.0, %v1142
    %v1144 = vrcp.pop %v1088
    %v1145 = vmul.f32 1.0, %v1144
    %v1146 = vrcp.pop %v1089
    %v1147 = vmul.f32 1.0, %v1146
    %v1148 = vrcp.pop %v1090
    %v1149 = vmul.f32 1.0, %v1148
    %v1150 = vrcp.pop %v1091
    %v1151 = vmul.f32 1.0, %v1150
    %v1152 = vrcp.pop %v1092
    %v1153 = vmul.f32 1.0, %v1152
    %v1154 = vrcp.pop %v1093
    %v1155 = vmul.f32 1.0, %v1154
    %v1156 = vrcp.pop %v1094
    %v1157 = vmul.f32 1.0, %v1156
    %v1158 = vrcp.pop %v1095
    %v1159 = vmul.f32 1.0, %v1158
    %v1160 = vadd.f32 %v1097, 1.0
    %v1161 = vadd.f32 %v1099, 1.0
    %v1162 = vadd.f32 %v1101, 1.0
    %v1163 = vadd.f32 %v1103, 1.0
    %v1164 = vadd.f32 %v1105, 1.0
    %v1165 = vadd.f32 %v1107, 1.0
    %v1166 = vadd.f32 %v1109, 1.0
    %v1167 = vadd.f32 %v1111, 1.0
    %v1168 = vadd.f32 %v1113, 1.0
    %v1169 = vadd.f32 %v1115, 1.0
    %v1170 = vadd.f32 %v1117, 1.0
    %v1171 = vadd.f32 %v1119, 1.0
    %v1172 = vadd.f32 %v1121, 1.0
    %v1173 = vadd.f32 %v1123, 1.0
    %v1174 = vadd.f32 %v1125, 1.0
    %v1175 = vadd.f32 %v1127, 1.0
    %v1176 = vadd.f32 %v1129, 1.0
    %v1177 = vadd.f32 %v1131, 1.0
    %v1178 = vadd.f32 %v1133, 1.0
    %v1179 = vadd.f32 %v1135, 1.0
    %v1180 = vadd.f32 %v1137, 1.0
    %v1181 = vadd.f32 %v1139, 1.0
    %v1182 = vadd.f32 %v1141, 1.0
    %v1183 = vadd.f32 %v1143, 1.0
    %v1184 = vadd.f32 %v1145, 1.0
    %v1185 = vadd.f32 %v1147, 1.0
    %v1186 = vadd.f32 %v1149, 1.0
    %v1187 = vadd.f32 %v1151, 1.0
    %v1188 = vadd.f32 %v1153, 1.0
    %v1189 = vadd.f32 %v1155, 1.0
    %v1190 = vadd.f32 %v1157, 1.0
    %v1191 = vadd.f32 %v1159, 1.0
    %v1192 = vmul.f32 %v613, %v1160
    %v1193 = vmul.f32 %v614, %v1161
    %v1194 = vmul.f32 %v615, %v1162
    %v1195 = vmul.f32 %v616, %v1163
    %v1196 = vmul.f32 %v617, %v1164
    %v1197 = vmul.f32 %v618, %v1165
    %v1198 = vmul.f32 %v619, %v1166
    %v1199 = vmul.f32 %v620, %v1167
    %v1200 = vmul.f32 %v621, %v1168
    %v1201 = vmul.f32 %v622, %v1169
    %v1202 = vmul.f32 %v623, %v1170
    %v1203 = vmul.f32 %v624, %v1171
    %v1204 = vmul.f32 %v625, %v1172
    %v1205 = vmul.f32 %v626, %v1173
    %v1206 = vmul.f32 %v627, %v1174
    %v1207 = vmul.f32 %v628, %v1175
    %v1208 = vmul.f32 %v629, %v1176
    %v1209 = vmul.f32 %v630, %v1177
    %v1210 = vmul.f32 %v631, %v1178
    %v1211 = vmul.f32 %v632, %v1179
    %v1212 = vmul.f32 %v633, %v1180
    %v1213 = vmul.f32 %v634, %v1181
    %v1214 = vmul.f32 %v635, %v1182
    %v1215 = vmul.f32 %v636, %v1183
    %v1216 = vmul.f32 %v637, %v1184
    %v1217 = vmul.f32 %v638, %v1185
    %v1218 = vmul.f32 %v639, %v1186
    %v1219 = vmul.f32 %v640, %v1187
    %v1220 = vmul.f32 %v641, %v1188
    %v1221 = vmul.f32 %v642, %v1189
    %v1222 = vmul.f32 %v643, %v1190
    %v1223 = vmul.f32 %v644, %v1191
    %1224 = vst [vmem:[#allocation11] sm:$0xff] %v1192
    %1225 = vst [vmem:[#allocation11 + $0x8] sm:$0xff] %v1193
    %1226 = vst [vmem:[#allocation11 + $0x10] sm:$0xff] %v1194
    %1227 = vst [vmem:[#allocation11 + $0x18] sm:$0xff] %v1195
    %1228 = vst [vmem:[#allocation11 + $0x20] sm:$0xff] %v1196
    %1229 = vst [vmem:[#allocation11 + $0x28] sm:$0xff] %v1197
    %1230 = vst [vmem:[#allocation11 + $0x30] sm:$0xff] %v1198
    %1231 = vst [vmem:[#allocation11 + $0x38] sm:$0xff] %v1199
    %1232 = vst [vmem:[#allocation11 + $0x40] sm:$0xff] %v1200
    %1233 = vst [vmem:[#allocation11 + $0x48] sm:$0xff] %v1201
    %1234 = vst [vmem:[#allocation11 + $0x50] sm:$0xff] %v1202
    %1235 = vst [vmem:[#allocation11 + $0x58] sm:$0xff] %v1203
    %1236 = vst [vmem:[#allocation11 + $0x60] sm:$0xff] %v1204
    %1237 = vst [vmem:[#allocation11 + $0x68] sm:$0xff] %v1205
    %1238 = vst [vmem:[#allocation11 + $0x70] sm:$0xff] %v1206
    %1239 = vst [vmem:[#allocation11 + $0x78] sm:$0xff] %v1207
    %1240 = vst [vmem:[#allocation11 + $0x80] sm:$0xff] %v1208
    %1241 = vst [vmem:[#allocation11 + $0x88] sm:$0xff] %v1209
    %1242 = vst [vmem:[#allocation11 + $0x90] sm:$0xff] %v1210
    %1243 = vst [vmem:[#allocation11 + $0x98] sm:$0xff] %v1211
    %1244 = vst [vmem:[#allocation11 + $0xa0] sm:$0xff] %v1212
    %1245 = vst [vmem:[#allocation11 + $0xa8] sm:$0xff] %v1213
    %1246 = vst [vmem:[#allocation11 + $0xb0] sm:$0xff] %v1214
    %1247 = vst [vmem:[#allocation11 + $0xb8] sm:$0xff] %v1215
    %1248 = vst [vmem:[#allocation11 + $0xc0] sm:$0xff] %v1216
    %1249 = vst [vmem:[#allocation11 + $0xc8] sm:$0xff] %v1217
    %1250 = vst [vmem:[#allocation11 + $0xd0] sm:$0xff] %v1218
    %1251 = vst [vmem:[#allocation11 + $0xd8] sm:$0xff] %v1219
    %1252 = vst [vmem:[#allocation11 + $0xe0] sm:$0xff] %v1220
    %1253 = vst [vmem:[#allocation11 + $0xe8] sm:$0xff] %v1221
    %1254 = vst [vmem:[#allocation11 + $0xf0] sm:$0xff] %v1222
    %1255 = vst [vmem:[#allocation11 + $0xf8] sm:$0xff] %v1223
    %s1256 = scalar_lea.vmem [#allocation2], 256
    %v1257 = vld [vmem:[%s1256] sm:$0xff]
    %v1258 = vld [vmem:[%s1256 + $0x8] sm:$0xff]
    %v1259 = vld [vmem:[%s1256 + $0x10] sm:$0xff]
    %v1260 = vld [vmem:[%s1256 + $0x18] sm:$0xff]
    %v1261 = vld [vmem:[%s1256 + $0x20] sm:$0xff]
    %v1262 = vld [vmem:[%s1256 + $0x28] sm:$0xff]
    %v1263 = vld [vmem:[%s1256 + $0x30] sm:$0xff]
    %v1264 = vld [vmem:[%s1256 + $0x38] sm:$0xff]
    %v1265 = vld [vmem:[%s1256 + $0x40] sm:$0xff]
    %v1266 = vld [vmem:[%s1256 + $0x48] sm:$0xff]
    %v1267 = vld [vmem:[%s1256 + $0x50] sm:$0xff]
    %v1268 = vld [vmem:[%s1256 + $0x58] sm:$0xff]
    %v1269 = vld [vmem:[%s1256 + $0x60] sm:$0xff]
    %v1270 = vld [vmem:[%s1256 + $0x68] sm:$0xff]
    %v1271 = vld [vmem:[%s1256 + $0x70] sm:$0xff]
    %v1272 = vld [vmem:[%s1256 + $0x78] sm:$0xff]
    %v1273 = vld [vmem:[%s1256 + $0x80] sm:$0xff]
    %v1274 = vld [vmem:[%s1256 + $0x88] sm:$0xff]
    %v1275 = vld [vmem:[%s1256 + $0x90] sm:$0xff]
    %v1276 = vld [vmem:[%s1256 + $0x98] sm:$0xff]
    %v1277 = vld [vmem:[%s1256 + $0xa0] sm:$0xff]
    %v1278 = vld [vmem:[%s1256 + $0xa8] sm:$0xff]
    %v1279 = vld [vmem:[%s1256 + $0xb0] sm:$0xff]
    %v1280 = vld [vmem:[%s1256 + $0xb8] sm:$0xff]
    %v1281 = vld [vmem:[%s1256 + $0xc0] sm:$0xff]
    %v1282 = vld [vmem:[%s1256 + $0xc8] sm:$0xff]
    %v1283 = vld [vmem:[%s1256 + $0xd0] sm:$0xff]
    %v1284 = vld [vmem:[%s1256 + $0xd8] sm:$0xff]
    %v1285 = vld [vmem:[%s1256 + $0xe0] sm:$0xff]
    %v1286 = vld [vmem:[%s1256 + $0xe8] sm:$0xff]
    %v1287 = vld [vmem:[%s1256 + $0xf0] sm:$0xff]
    %v1288 = vld [vmem:[%s1256 + $0xf8] sm:$0xff]
    %v1289 = vmul.f32 %v1257, %v171
    %v1290 = vmul.f32 %v1258, %v171
    %v1291 = vmul.f32 %v1259, %v171
    %v1292 = vmul.f32 %v1260, %v171
    %v1293 = vmul.f32 %v1261, %v171
    %v1294 = vmul.f32 %v1262, %v171
    %v1295 = vmul.f32 %v1263, %v171
    %v1296 = vmul.f32 %v1264, %v171
    %v1297 = vmul.f32 %v1265, %v171
    %v1298 = vmul.f32 %v1266, %v171
    %v1299 = vmul.f32 %v1267, %v171
    %v1300 = vmul.f32 %v1268, %v171
    %v1301 = vmul.f32 %v1269, %v171
    %v1302 = vmul.f32 %v1270, %v171
    %v1303 = vmul.f32 %v1271, %v171
    %v1304 = vmul.f32 %v1272, %v171
    %v1305 = vmul.f32 %v1273, %v171
    %v1306 = vmul.f32 %v1274, %v171
    %v1307 = vmul.f32 %v1275, %v171
    %v1308 = vmul.f32 %v1276, %v171
    %v1309 = vmul.f32 %v1277, %v171
    %v1310 = vmul.f32 %v1278, %v171
    %v1311 = vmul.f32 %v1279, %v171
    %v1312 = vmul.f32 %v1280, %v171
    %v1313 = vmul.f32 %v1281, %v171
    %v1314 = vmul.f32 %v1282, %v171
    %v1315 = vmul.f32 %v1283, %v171
    %v1316 = vmul.f32 %v1284, %v171
    %v1317 = vmul.f32 %v1285, %v171
    %v1318 = vmul.f32 %v1286, %v171
    %v1319 = vmul.f32 %v1287, %v171
    %v1320 = vmul.f32 %v1288, %v171
    %1321 = vadd.xlane.f32.xlu0 %v1289
    %v1322 = vpop.xlane.xlu0 %1321
    %1323 = vadd.xlane.f32.xlu0 %v1290
    %v1324 = vpop.xlane.xlu0 %1323
    %1325 = vadd.xlane.f32.xlu0 %v1291
    %v1326 = vpop.xlane.xlu0 %1325
    %1327 = vadd.xlane.f32.xlu0 %v1292
    %v1328 = vpop.xlane.xlu0 %1327
    %1329 = vadd.xlane.f32.xlu0 %v1293
    %v1330 = vpop.xlane.xlu0 %1329
    %1331 = vadd.xlane.f32.xlu0 %v1294
    %v1332 = vpop.xlane.xlu0 %1331
    %1333 = vadd.xlane.f32.xlu0 %v1295
    %v1334 = vpop.xlane.xlu0 %1333
    %1335 = vadd.xlane.f32.xlu0 %v1296
    %v1336 = vpop.xlane.xlu0 %1335
    %1337 = vadd.xlane.f32.xlu0 %v1297
    %v1338 = vpop.xlane.xlu0 %1337
    %1339 = vadd.xlane.f32.xlu0 %v1298
    %v1340 = vpop.xlane.xlu0 %1339
    %1341 = vadd.xlane.f32.xlu0 %v1299
    %v1342 = vpop.xlane.xlu0 %1341
    %1343 = vadd.xlane.f32.xlu0 %v1300
    %v1344 = vpop.xlane.xlu0 %1343
    %1345 = vadd.xlane.f32.xlu0 %v1301
    %v1346 = vpop.xlane.xlu0 %1345
    %1347 = vadd.xlane.f32.xlu0 %v1302
    %v1348 = vpop.xlane.xlu0 %1347
    %1349 = vadd.xlane.f32.xlu0 %v1303
    %v1350 = vpop.xlane.xlu0 %1349
    %1351 = vadd.xlane.f32.xlu0 %v1304
    %v1352 = vpop.xlane.xlu0 %1351
    %1353 = vadd.xlane.f32.xlu0 %v1305
    %v1354 = vpop.xlane.xlu0 %1353
    %1355 = vadd.xlane.f32.xlu0 %v1306
    %v1356 = vpop.xlane.xlu0 %1355
    %1357 = vadd.xlane.f32.xlu0 %v1307
    %v1358 = vpop.xlane.xlu0 %1357
    %1359 = vadd.xlane.f32.xlu0 %v1308
    %v1360 = vpop.xlane.xlu0 %1359
    %1361 = vadd.xlane.f32.xlu0 %v1309
    %v1362 = vpop.xlane.xlu0 %1361
    %1363 = vadd.xlane.f32.xlu0 %v1310
    %v1364 = vpop.xlane.xlu0 %1363
    %1365 = vadd.xlane.f32.xlu0 %v1311
    %v1366 = vpop.xlane.xlu0 %1365
    %1367 = vadd.xlane.f32.xlu0 %v1312
    %v1368 = vpop.xlane.xlu0 %1367
    %1369 = vadd.xlane.f32.xlu0 %v1313
    %v1370 = vpop.xlane.xlu0 %1369
    %1371 = vadd.xlane.f32.xlu0 %v1314
    %v1372 = vpop.xlane.xlu0 %1371
    %1373 = vadd.xlane.f32.xlu0 %v1315
    %v1374 = vpop.xlane.xlu0 %1373
    %1375 = vadd.xlane.f32.xlu0 %v1316
    %v1376 = vpop.xlane.xlu0 %1375
    %1377 = vadd.xlane.f32.xlu0 %v1317
    %v1378 = vpop.xlane.xlu0 %1377
    %1379 = vadd.xlane.f32.xlu0 %v1318
    %v1380 = vpop.xlane.xlu0 %1379
    %1381 = vadd.xlane.f32.xlu0 %v1319
    %v1382 = vpop.xlane.xlu0 %1381
    %1383 = vadd.xlane.f32.xlu0 %v1320
    %v1384 = vpop.xlane.xlu0 %1383
    %v1385 = vmax.f32 %v1322, %v1330
    %v1386 = vmax.f32 %v1324, %v1332
    %v1387 = vmax.f32 %v1326, %v1334
    %v1388 = vmax.f32 %v1328, %v1336
    %v1389 = vmax.f32 %v1385, %v1338
    %v1390 = vmax.f32 %v1386, %v1340
    %v1391 = vmax.f32 %v1387, %v1342
    %v1392 = vmax.f32 %v1388, %v1344
    %v1393 = vmax.f32 %v1389, %v1346
    %v1394 = vmax.f32 %v1390, %v1348
    %v1395 = vmax.f32 %v1391, %v1350
    %v1396 = vmax.f32 %v1392, %v1352
    %v1397 = vmax.f32 %v1393, %v1354
    %v1398 = vmax.f32 %v1394, %v1356
    %v1399 = vmax.f32 %v1395, %v1358
    %v1400 = vmax.f32 %v1396, %v1360
    %v1401 = vmax.f32 %v1397, %v1362
    %v1402 = vmax.f32 %v1398, %v1364
    %v1403 = vmax.f32 %v1399, %v1366
    %v1404 = vmax.f32 %v1400, %v1368
    %v1405 = vmax.f32 %v1401, %v1370
    %v1406 = vmax.f32 %v1402, %v1372
    %v1407 = vmax.f32 %v1403, %v1374
    %v1408 = vmax.f32 %v1404, %v1376
    %v1409 = vmax.f32 %v1405, %v1378
    %v1410 = vmax.f32 %v1406, %v1380
    %v1411 = vmax.f32 %v1407, %v1382
    %v1412 = vmax.f32 %v1408, %v1384
    %v1413 = vmax.f32 %v1409, %v1410
    %v1414 = vmax.f32 %v1411, %v1412
    %v1415 = vmax.f32 %v1413, %v1414
    %v1416 = vrot.slane %v1415, 4
    %v1417 = vmax.f32 %v1415, %v1416
    %v1418 = vrot.slane %v1417, 2
    %v1419 = vmax.f32 %v1417, %v1418
    %v1420 = vrot.slane %v1419, 1
    %v1421 = vmax.f32 %v1419, %v1420
    %v1422 = vsub.f32 %v1322, %v1421
    %v1423 = vsub.f32 %v1324, %v1421
    %v1424 = vsub.f32 %v1326, %v1421
    %v1425 = vsub.f32 %v1328, %v1421
    %v1426 = vsub.f32 %v1330, %v1421
    %v1427 = vsub.f32 %v1332, %v1421
    %v1428 = vsub.f32 %v1334, %v1421
    %v1429 = vsub.f32 %v1336, %v1421
    %v1430 = vsub.f32 %v1338, %v1421
    %v1431 = vsub.f32 %v1340, %v1421
    %v1432 = vsub.f32 %v1342, %v1421
    %v1433 = vsub.f32 %v1344, %v1421
    %v1434 = vsub.f32 %v1346, %v1421
    %v1435 = vsub.f32 %v1348, %v1421
    %v1436 = vsub.f32 %v1350, %v1421
    %v1437 = vsub.f32 %v1352, %v1421
    %v1438 = vsub.f32 %v1354, %v1421
    %v1439 = vsub.f32 %v1356, %v1421
    %v1440 = vsub.f32 %v1358, %v1421
    %v1441 = vsub.f32 %v1360, %v1421
    %v1442 = vsub.f32 %v1362, %v1421
    %v1443 = vsub.f32 %v1364, %v1421
    %v1444 = vsub.f32 %v1366, %v1421
    %v1445 = vsub.f32 %v1368, %v1421
    %v1446 = vsub.f32 %v1370, %v1421
    %v1447 = vsub.f32 %v1372, %v1421
    %v1448 = vsub.f32 %v1374, %v1421
    %v1449 = vsub.f32 %v1376, %v1421
    %v1450 = vsub.f32 %v1378, %v1421
    %v1451 = vsub.f32 %v1380, %v1421
    %v1452 = vsub.f32 %v1382, %v1421
    %v1453 = vsub.f32 %v1384, %v1421
    %v1454 = vmul.f32 %v1422, 1.442695
    %v1455 = vpow.pop %v1454
    %v1456 = vmul.f32 %v1423, 1.442695
    %v1457 = vpow.pop %v1456
    %v1458 = vmul.f32 %v1424, 1.442695
    %v1459 = vpow.pop %v1458
    %v1460 = vmul.f32 %v1425, 1.442695
    %v1461 = vpow.pop %v1460
    %v1462 = vmul.f32 %v1426, 1.442695
    %v1463 = vpow.pop %v1462
    %v1464 = vmul.f32 %v1427, 1.442695
    %v1465 = vpow.pop %v1464
    %v1466 = vmul.f32 %v1428, 1.442695
    %v1467 = vpow.pop %v1466
    %v1468 = vmul.f32 %v1429, 1.442695
    %v1469 = vpow.pop %v1468
    %v1470 = vmul.f32 %v1430, 1.442695
    %v1471 = vpow.pop %v1470
    %v1472 = vmul.f32 %v1431, 1.442695
    %v1473 = vpow.pop %v1472
    %v1474 = vmul.f32 %v1432, 1.442695
    %v1475 = vpow.pop %v1474
    %v1476 = vmul.f32 %v1433, 1.442695
    %v1477 = vpow.pop %v1476
    %v1478 = vmul.f32 %v1434, 1.442695
    %v1479 = vpow.pop %v1478
    %v1480 = vmul.f32 %v1435, 1.442695
    %v1481 = vpow.pop %v1480
    %v1482 = vmul.f32 %v1436, 1.442695
    %v1483 = vpow.pop %v1482
    %v1484 = vmul.f32 %v1437, 1.442695
    %v1485 = vpow.pop %v1484
    %v1486 = vmul.f32 %v1438, 1.442695
    %v1487 = vpow.pop %v1486
    %v1488 = vmul.f32 %v1439, 1.442695
    %v1489 = vpow.pop %v1488
    %v1490 = vmul.f32 %v1440, 1.442695
    %v1491 = vpow.pop %v1490
    %v1492 = vmul.f32 %v1441, 1.442695
    %v1493 = vpow.pop %v1492
    %v1494 = vmul.f32 %v1442, 1.442695
    %v1495 = vpow.pop %v1494
    %v1496 = vmul.f32 %v1443, 1.442695
    %v1497 = vpow.pop %v1496
    %v1498 = vmul.f32 %v1444, 1.442695
    %v1499 = vpow.pop %v1498
    %v1500 = vmul.f32 %v1445, 1.442695
    %v1501 = vpow.pop %v1500
    %v1502 = vmul.f32 %v1446, 1.442695
    %v1503 = vpow.pop %v1502
    %v1504 = vmul.f32 %v1447, 1.442695
    %v1505 = vpow.pop %v1504
    %v1506 = vmul.f32 %v1448, 1.442695
    %v1507 = vpow.pop %v1506
    %v1508 = vmul.f32 %v1449, 1.442695
    %v1509 = vpow.pop %v1508
    %v1510 = vmul.f32 %v1450, 1.442695
    %v1511 = vpow.pop %v1510
    %v1512 = vmul.f32 %v1451, 1.442695
    %v1513 = vpow.pop %v1512
    %v1514 = vmul.f32 %v1452, 1.442695
    %v1515 = vpow.pop %v1514
    %v1516 = vmul.f32 %v1453, 1.442695
    %v1517 = vpow.pop %v1516
    %v1518 = vadd.f32 %v1455, %v1457
    %v1519 = vadd.f32 %v1518, %v1459
    %v1520 = vadd.f32 %v1519, %v1461
    %v1521 = vadd.f32 %v1520, %v1463
    %v1522 = vadd.f32 %v1521, %v1465
    %v1523 = vadd.f32 %v1522, %v1467
    %v1524 = vadd.f32 %v1523, %v1469
    %v1525 = vadd.f32 %v1524, %v1471
    %v1526 = vadd.f32 %v1525, %v1473
    %v1527 = vadd.f32 %v1526, %v1475
    %v1528 = vadd.f32 %v1527, %v1477
    %v1529 = vadd.f32 %v1528, %v1479
    %v1530 = vadd.f32 %v1529, %v1481
    %v1531 = vadd.f32 %v1530, %v1483
    %v1532 = vadd.f32 %v1531, %v1485
    %v1533 = vadd.f32 %v1532, %v1487
    %v1534 = vadd.f32 %v1533, %v1489
    %v1535 = vadd.f32 %v1534, %v1491
    %v1536 = vadd.f32 %v1535, %v1493
    %v1537 = vadd.f32 %v1536, %v1495
    %v1538 = vadd.f32 %v1537, %v1497
    %v1539 = vadd.f32 %v1538, %v1499
    %v1540 = vadd.f32 %v1539, %v1501
    %v1541 = vadd.f32 %v1540, %v1503
    %v1542 = vadd.f32 %v1541, %v1505
    %v1543 = vadd.f32 %v1542, %v1507
    %v1544 = vadd.f32 %v1543, %v1509
    %v1545 = vadd.f32 %v1544, %v1511
    %v1546 = vadd.f32 %v1545, %v1513
    %v1547 = vadd.f32 %v1546, %v1515
    %v1548 = vadd.f32 %v1547, %v1517
    %v1549 = vrot.slane %v1548, 4
    %v1550 = vadd.f32 %v1548, %v1549
    %v1551 = vrot.slane %v1550, 2
    %v1552 = vadd.f32 %v1550, %v1551
    %v1553 = vrot.slane %v1552, 1
    %v1554 = vadd.f32 %v1552, %v1553
    %v1555 = vmul.f32 %v1257, %v1455
    %v1556 = vmul.f32 %v1258, %v1457
    %v1557 = vmul.f32 %v1259, %v1459
    %v1558 = vmul.f32 %v1260, %v1461
    %v1559 = vmul.f32 %v1261, %v1463
    %v1560 = vmul.f32 %v1262, %v1465
    %v1561 = vmul.f32 %v1263, %v1467
    %v1562 = vmul.f32 %v1264, %v1469
    %v1563 = vmul.f32 %v1265, %v1471
    %v1564 = vmul.f32 %v1266, %v1473
    %v1565 = vmul.f32 %v1267, %v1475
    %v1566 = vmul.f32 %v1268, %v1477
    %v1567 = vmul.f32 %v1269, %v1479
    %v1568 = vmul.f32 %v1270, %v1481
    %v1569 = vmul.f32 %v1271, %v1483
    %v1570 = vmul.f32 %v1272, %v1485
    %v1571 = vmul.f32 %v1273, %v1487
    %v1572 = vmul.f32 %v1274, %v1489
    %v1573 = vmul.f32 %v1275, %v1491
    %v1574 = vmul.f32 %v1276, %v1493
    %v1575 = vmul.f32 %v1277, %v1495
    %v1576 = vmul.f32 %v1278, %v1497
    %v1577 = vmul.f32 %v1279, %v1499
    %v1578 = vmul.f32 %v1280, %v1501
    %v1579 = vmul.f32 %v1281, %v1503
    %v1580 = vmul.f32 %v1282, %v1505
    %v1581 = vmul.f32 %v1283, %v1507
    %v1582 = vmul.f32 %v1284, %v1509
    %v1583 = vmul.f32 %v1285, %v1511
    %v1584 = vmul.f32 %v1286, %v1513
    %v1585 = vmul.f32 %v1287, %v1515
    %v1586 = vmul.f32 %v1288, %v1517
    %v1587 = vadd.f32 %v1555, %v1556
    %v1588 = vadd.f32 %v1587, %v1557
    %v1589 = vadd.f32 %v1588, %v1558
    %v1590 = vadd.f32 %v1589, %v1559
    %v1591 = vadd.f32 %v1590, %v1560
    %v1592 = vadd.f32 %v1591, %v1561
    %v1593 = vadd.f32 %v1592, %v1562
    %v1594 = vadd.f32 %v1593, %v1563
    %v1595 = vadd.f32 %v1594, %v1564
    %v1596 = vadd.f32 %v1595, %v1565
    %v1597 = vadd.f32 %v1596, %v1566
    %v1598 = vadd.f32 %v1597, %v1567
    %v1599 = vadd.f32 %v1598, %v1568
    %v1600 = vadd.f32 %v1599, %v1569
    %v1601 = vadd.f32 %v1600, %v1570
    %v1602 = vadd.f32 %v1601, %v1571
    %v1603 = vadd.f32 %v1602, %v1572
    %v1604 = vadd.f32 %v1603, %v1573
    %v1605 = vadd.f32 %v1604, %v1574
    %v1606 = vadd.f32 %v1605, %v1575
    %v1607 = vadd.f32 %v1606, %v1576
    %v1608 = vadd.f32 %v1607, %v1577
    %v1609 = vadd.f32 %v1608, %v1578
    %v1610 = vadd.f32 %v1609, %v1579
    %v1611 = vadd.f32 %v1610, %v1580
    %v1612 = vadd.f32 %v1611, %v1581
    %v1613 = vadd.f32 %v1612, %v1582
    %v1614 = vadd.f32 %v1613, %v1583
    %v1615 = vadd.f32 %v1614, %v1584
    %v1616 = vadd.f32 %v1615, %v1585
    %v1617 = vadd.f32 %v1616, %v1586
    %v1618 = vrot.slane %v1617, 4
    %v1619 = vadd.f32 %v1617, %v1618
    %v1620 = vrot.slane %v1619, 2
    %v1621 = vadd.f32 %v1619, %v1620
    %v1622 = vrot.slane %v1621, 1
    %v1623 = vadd.f32 %v1621, %v1622
    %v1624 = vrcp.pop %v1554
    %v1625 = vmul.f32 %v1623, %v1624
    %1626 = vmatprep.subr.mxu0 0.0
    %1627 = vmatpush1.msra.mxu0 %v88
    %1628 = vmatprep.subr.mxu0 0.0
    %1629 = vmatpush1.msra.mxu0 %v89
    %1630 = vmatprep.subr.mxu0 0.0
    %1631 = vmatpush1.msra.mxu0 %v90
    %1632 = vmatprep.subr.mxu0 0.0
    %1633 = vmatpush1.msra.mxu0 %v91
    %1634 = vmatprep.subr.mxu0 0.0
    %1635 = vmatpush1.msra.mxu0 %v92
    %1636 = vmatprep.subr.mxu0 0.0
    %1637 = vmatpush1.msra.mxu0 %v93
    %1638 = vmatprep.subr.mxu0 0.0
    %1639 = vmatpush1.msra.mxu0 %v94
    %1640 = vmatprep.subr.mxu0 0.0
    %1641 = vmatpush1.msra.mxu0 %v95
    %1642 = vmatprep.subr.mxu0 0.0
    %1643 = vmatpush1.msra.mxu0 %v96
    %1644 = vmatprep.subr.mxu0 0.0
    %1645 = vmatpush1.msra.mxu0 %v97
    %1646 = vmatprep.subr.mxu0 0.0
    %1647 = vmatpush1.msra.mxu0 %v98
    %1648 = vmatprep.subr.mxu0 0.0
    %1649 = vmatpush1.msra.mxu0 %v99
    %1650 = vmatprep.subr.mxu0 0.0
    %1651 = vmatpush1.msra.mxu0 %v100
    %1652 = vmatprep.subr.mxu0 0.0
    %1653 = vmatpush1.msra.mxu0 %v101
    %1654 = vmatprep.subr.mxu0 0.0
    %1655 = vmatpush1.msra.mxu0 %v102
    %1656 = vmatprep.subr.mxu0 0.0
    %1657 = vmatpush1.msra.mxu0 %v103
    %1658 = vmatprep.subr.mxu0 0.0
    %1659 = vmatpush1.msra.mxu0 0.0
    %1660 = vmatprep.subr.mxu0 0.0
    %1661 = vmatpush1.msra.mxu0 0.0
    %1662 = vmatprep.subr.mxu0 0.0
    %1663 = vmatpush1.msra.mxu0 0.0
    %1664 = vmatprep.subr.mxu0 0.0
    %1665 = vmatpush1.msra.mxu0 0.0
    %1666 = vmatprep.subr.mxu0 0.0
    %1667 = vmatpush1.msra.mxu0 0.0
    %1668 = vmatprep.subr.mxu0 0.0
    %1669 = vmatpush1.msra.mxu0 0.0
    %1670 = vmatprep.subr.mxu0 0.0
    %1671 = vmatpush1.msra.mxu0 0.0
    %1672 = vmatprep.subr.mxu0 0.0
    %1673 = vmatpush1.msra.mxu0 0.0
    %1674 = vmatprep.subr.mxu0 0.0
    %1675 = vmatpush1.msra.mxu0 0.0
    %1676 = vmatprep.subr.mxu0 0.0
    %1677 = vmatpush1.msra.mxu0 0.0
    %1678 = vmatprep.subr.mxu0 0.0
    %1679 = vmatpush1.msra.mxu0 0.0
    %1680 = vmatprep.subr.mxu0 0.0
    %1681 = vmatpush1.msra.mxu0 0.0
    %1682 = vmatprep.subr.mxu0 0.0
    %1683 = vmatpush1.msra.mxu0 0.0
    %1684 = vmatprep.subr.mxu0 0.0
    %1685 = vmatpush1.msra.mxu0 0.0
    %1686 = vmatprep.subr.mxu0 0.0
    %1687 = vmatpush1.msra.mxu0 0.0
    %1688 = vmatprep.subr.mxu0 0.0
    %1689 = vmatpush1.msra.mxu0 0.0
    %1690 = vmatprep.mubr.f32.mxu0 0.0
    %1691 = vmatmul.mubr.f32.gmra.mrb[0].mxu0 %v1625
    %v1692 = vpop.f32.mrb[0].mxu0
    %v1693 = vadd.f32 %v510, %v1692
    %v1694 = vpop.f32.mrb[0].mxu0
    %1695 = vdwg.mxu0
    %v1696 = vsel %vm582, %v1693, 0.0
    %1697 = vadd.xlane.f32.xlu0 %v1696
    %v1698 = vpop.xlane.xlu0 %1697
    %v1699 = vmul.f32 %v1698, %v586
    %v1700 = vsub.f32 %v1693, %v1699
    %v1701 = vmul.f32 %v1700, %v1700
    %v1702 = vsel %vm582, %v1701, 0.0
    %1703 = vadd.xlane.f32.xlu0 %v1702
    %v1704 = vpop.xlane.xlu0 %1703
    %v1705 = vmul.f32 %v1704, %v586
    %v1706 = vadd.f32 %v1705, 1e-05
    %v1707 = vrsqrt.pop %v1706
    %v1708 = vmul.f32 %v1700, %v1707
    %v1709 = vmul.f32 %v1708, %v597
    %v1710 = vadd.f32 %v1709, %v600
    %v1711 = vxor.u32 %v1710, 2147483648
    %v1712 = vmul.f32 %v1711, 1.442695
    %v1713 = vpow.pop %v1712
    %v1714 = vadd.f32 %v1713, 1.0
    %v1715 = vrcp.pop %v1714
    %v1716 = vmul.f32 1.0, %v1715
    %v1717 = vlaneseq
    %v1718 = vshrl.u32 %v1717, 7
    %v1719 = vsub.s32 0, %v1718
    %v1720 = vrot.slane %v1716, %v1719
    %v1721 = vmul.f32 %v1257, %v1720
    %v1722 = vmul.f32 %v1258, %v1720
    %v1723 = vmul.f32 %v1259, %v1720
    %v1724 = vmul.f32 %v1260, %v1720
    %v1725 = vmul.f32 %v1261, %v1720
    %v1726 = vmul.f32 %v1262, %v1720
    %v1727 = vmul.f32 %v1263, %v1720
    %v1728 = vmul.f32 %v1264, %v1720
    %v1729 = vmul.f32 %v1265, %v1720
    %v1730 = vmul.f32 %v1266, %v1720
    %v1731 = vmul.f32 %v1267, %v1720
    %v1732 = vmul.f32 %v1268, %v1720
    %v1733 = vmul.f32 %v1269, %v1720
    %v1734 = vmul.f32 %v1270, %v1720
    %v1735 = vmul.f32 %v1271, %v1720
    %v1736 = vmul.f32 %v1272, %v1720
    %v1737 = vmul.f32 %v1273, %v1720
    %v1738 = vmul.f32 %v1274, %v1720
    %v1739 = vmul.f32 %v1275, %v1720
    %v1740 = vmul.f32 %v1276, %v1720
    %v1741 = vmul.f32 %v1277, %v1720
    %v1742 = vmul.f32 %v1278, %v1720
    %v1743 = vmul.f32 %v1279, %v1720
    %v1744 = vmul.f32 %v1280, %v1720
    %v1745 = vmul.f32 %v1281, %v1720
    %v1746 = vmul.f32 %v1282, %v1720
    %v1747 = vmul.f32 %v1283, %v1720
    %v1748 = vmul.f32 %v1284, %v1720
    %v1749 = vmul.f32 %v1285, %v1720
    %v1750 = vmul.f32 %v1286, %v1720
    %v1751 = vmul.f32 %v1287, %v1720
    %v1752 = vmul.f32 %v1288, %v1720
    %v1753 = vadd.f32 %v1721, %v1722
    %v1754 = vadd.f32 %v1753, %v1723
    %v1755 = vadd.f32 %v1754, %v1724
    %v1756 = vadd.f32 %v1755, %v1725
    %v1757 = vadd.f32 %v1756, %v1726
    %v1758 = vadd.f32 %v1757, %v1727
    %v1759 = vadd.f32 %v1758, %v1728
    %v1760 = vadd.f32 %v1759, %v1729
    %v1761 = vadd.f32 %v1760, %v1730
    %v1762 = vadd.f32 %v1761, %v1731
    %v1763 = vadd.f32 %v1762, %v1732
    %v1764 = vadd.f32 %v1763, %v1733
    %v1765 = vadd.f32 %v1764, %v1734
    %v1766 = vadd.f32 %v1765, %v1735
    %v1767 = vadd.f32 %v1766, %v1736
    %v1768 = vadd.f32 %v1767, %v1737
    %v1769 = vadd.f32 %v1768, %v1738
    %v1770 = vadd.f32 %v1769, %v1739
    %v1771 = vadd.f32 %v1770, %v1740
    %v1772 = vadd.f32 %v1771, %v1741
    %v1773 = vadd.f32 %v1772, %v1742
    %v1774 = vadd.f32 %v1773, %v1743
    %v1775 = vadd.f32 %v1774, %v1744
    %v1776 = vadd.f32 %v1775, %v1745
    %v1777 = vadd.f32 %v1776, %v1746
    %v1778 = vadd.f32 %v1777, %v1747
    %v1779 = vadd.f32 %v1778, %v1748
    %v1780 = vadd.f32 %v1779, %v1749
    %v1781 = vadd.f32 %v1780, %v1750
    %v1782 = vadd.f32 %v1781, %v1751
    %v1783 = vadd.f32 %v1782, %v1752
    %v1784 = vrot.slane %v1783, 4
    %v1785 = vadd.f32 %v1783, %v1784
    %v1786 = vrot.slane %v1785, 2
    %v1787 = vadd.f32 %v1785, %v1786
    %v1788 = vrot.slane %v1787, 1
    %v1789 = vadd.f32 %v1787, %v1788
    %v1790 = vmul.f32 %v1789, %v682
    %1791 = vmatprep.subr.mxu0 0.0
    %1792 = vmatpush1.msra.mxu0 %v104
    %1793 = vmatprep.subr.mxu0 0.0
    %1794 = vmatpush1.msra.mxu0 %v105
    %1795 = vmatprep.subr.mxu0 0.0
    %1796 = vmatpush1.msra.mxu0 %v106
    %1797 = vmatprep.subr.mxu0 0.0
    %1798 = vmatpush1.msra.mxu0 %v107
    %1799 = vmatprep.subr.mxu0 0.0
    %1800 = vmatpush1.msra.mxu0 %v108
    %1801 = vmatprep.subr.mxu0 0.0
    %1802 = vmatpush1.msra.mxu0 %v109
    %1803 = vmatprep.subr.mxu0 0.0
    %1804 = vmatpush1.msra.mxu0 %v110
    %1805 = vmatprep.subr.mxu0 0.0
    %1806 = vmatpush1.msra.mxu0 %v111
    %1807 = vmatprep.subr.mxu0 0.0
    %1808 = vmatpush1.msra.mxu0 %v112
    %1809 = vmatprep.subr.mxu0 0.0
    %1810 = vmatpush1.msra.mxu0 %v113
    %1811 = vmatprep.subr.mxu0 0.0
    %1812 = vmatpush1.msra.mxu0 %v114
    %1813 = vmatprep.subr.mxu0 0.0
    %1814 = vmatpush1.msra.mxu0 %v115
    %1815 = vmatprep.subr.mxu0 0.0
    %1816 = vmatpush1.msra.mxu0 %v116
    %1817 = vmatprep.subr.mxu0 0.0
    %1818 = vmatpush1.msra.mxu0 %v117
    %1819 = vmatprep.subr.mxu0 0.0
    %1820 = vmatpush1.msra.mxu0 %v118
    %1821 = vmatprep.subr.mxu0 0.0
    %1822 = vmatpush1.msra.mxu0 %v119
    %1823 = vmatprep.subr.mxu0 0.0
    %1824 = vmatpush1.msra.mxu0 0.0
    %1825 = vmatprep.subr.mxu0 0.0
    %1826 = vmatpush1.msra.mxu0 0.0
    %1827 = vmatprep.subr.mxu0 0.0
    %1828 = vmatpush1.msra.mxu0 0.0
    %1829 = vmatprep.subr.mxu0 0.0
    %1830 = vmatpush1.msra.mxu0 0.0
    %1831 = vmatprep.subr.mxu0 0.0
    %1832 = vmatpush1.msra.mxu0 0.0
    %1833 = vmatprep.subr.mxu0 0.0
    %1834 = vmatpush1.msra.mxu0 0.0
    %1835 = vmatprep.subr.mxu0 0.0
    %1836 = vmatpush1.msra.mxu0 0.0
    %1837 = vmatprep.subr.mxu0 0.0
    %1838 = vmatpush1.msra.mxu0 0.0
    %1839 = vmatprep.subr.mxu0 0.0
    %1840 = vmatpush1.msra.mxu0 0.0
    %1841 = vmatprep.subr.mxu0 0.0
    %1842 = vmatpush1.msra.mxu0 0.0
    %1843 = vmatprep.subr.mxu0 0.0
    %1844 = vmatpush1.msra.mxu0 0.0
    %1845 = vmatprep.subr.mxu0 0.0
    %1846 = vmatpush1.msra.mxu0 0.0
    %1847 = vmatprep.subr.mxu0 0.0
    %1848 = vmatpush1.msra.mxu0 0.0
    %1849 = vmatprep.subr.mxu0 0.0
    %1850 = vmatpush1.msra.mxu0 0.0
    %1851 = vmatprep.subr.mxu0 0.0
    %1852 = vmatpush1.msra.mxu0 0.0
    %1853 = vmatprep.subr.mxu0 0.0
    %1854 = vmatpush1.msra.mxu0 0.0
    %1855 = vmatprep.mubr.f32.mxu0 0.0
    %1856 = vmatmul.mubr.f32.gmra.mrb[0].mxu0 %v1790
    %v1857 = vpop.f32.mrb[0].mxu0
    %v1858 = vadd.f32 %v684, %v1857
    %v1859 = vpop.f32.mrb[0].mxu0
    %1860 = vdwg.mxu0
    %1861 = vmatprep.subr.mxu0 0.0
    %1862 = vmatpush1.msra.mxu0 %v120
    %1863 = vmatprep.subr.mxu0 0.0
    %1864 = vmatpush1.msra.mxu0 %v121
    %1865 = vmatprep.subr.mxu0 0.0
    %1866 = vmatpush1.msra.mxu0 %v122
    %1867 = vmatprep.subr.mxu0 0.0
    %1868 = vmatpush1.msra.mxu0 %v123
    %1869 = vmatprep.subr.mxu0 0.0
    %1870 = vmatpush1.msra.mxu0 %v124
    %1871 = vmatprep.subr.mxu0 0.0
    %1872 = vmatpush1.msra.mxu0 %v125
    %1873 = vmatprep.subr.mxu0 0.0
    %1874 = vmatpush1.msra.mxu0 %v126
    %1875 = vmatprep.subr.mxu0 0.0
    %1876 = vmatpush1.msra.mxu0 %v127
    %1877 = vmatprep.subr.mxu0 0.0
    %1878 = vmatpush1.msra.mxu0 %v128
    %1879 = vmatprep.subr.mxu0 0.0
    %1880 = vmatpush1.msra.mxu0 %v129
    %1881 = vmatprep.subr.mxu0 0.0
    %1882 = vmatpush1.msra.mxu0 %v130
    %1883 = vmatprep.subr.mxu0 0.0
    %1884 = vmatpush1.msra.mxu0 %v131
    %1885 = vmatprep.subr.mxu0 0.0
    %1886 = vmatpush1.msra.mxu0 %v132
    %1887 = vmatprep.subr.mxu0 0.0
    %1888 = vmatpush1.msra.mxu0 %v133
    %1889 = vmatprep.subr.mxu0 0.0
    %1890 = vmatpush1.msra.mxu0 %v134
    %1891 = vmatprep.subr.mxu0 0.0
    %1892 = vmatpush1.msra.mxu0 %v135
    %1893 = vmatprep.subr.mxu0 0.0
    %1894 = vmatpush1.msra.mxu0 0.0
    %1895 = vmatprep.subr.mxu0 0.0
    %1896 = vmatpush1.msra.mxu0 0.0
    %1897 = vmatprep.subr.mxu0 0.0
    %1898 = vmatpush1.msra.mxu0 0.0
    %1899 = vmatprep.subr.mxu0 0.0
    %1900 = vmatpush1.msra.mxu0 0.0
    %1901 = vmatprep.subr.mxu0 0.0
    %1902 = vmatpush1.msra.mxu0 0.0
    %1903 = vmatprep.subr.mxu0 0.0
    %1904 = vmatpush1.msra.mxu0 0.0
    %1905 = vmatprep.subr.mxu0 0.0
    %1906 = vmatpush1.msra.mxu0 0.0
    %1907 = vmatprep.subr.mxu0 0.0
    %1908 = vmatpush1.msra.mxu0 0.0
    %1909 = vmatprep.subr.mxu0 0.0
    %1910 = vmatpush1.msra.mxu0 0.0
    %1911 = vmatprep.subr.mxu0 0.0
    %1912 = vmatpush1.msra.mxu0 0.0
    %1913 = vmatprep.subr.mxu0 0.0
    %1914 = vmatpush1.msra.mxu0 0.0
    %1915 = vmatprep.subr.mxu0 0.0
    %1916 = vmatpush1.msra.mxu0 0.0
    %1917 = vmatprep.subr.mxu0 0.0
    %1918 = vmatpush1.msra.mxu0 0.0
    %1919 = vmatprep.subr.mxu0 0.0
    %1920 = vmatpush1.msra.mxu0 0.0
    %1921 = vmatprep.subr.mxu0 0.0
    %1922 = vmatpush1.msra.mxu0 0.0
    %1923 = vmatprep.subr.mxu0 0.0
    %1924 = vmatpush1.msra.mxu0 0.0
    %1925 = vmatprep.mubr.f32.mxu0 0.0
    %1926 = vmatmul.mubr.f32.gmra.mrb[0].mxu0 %v1858
    %v1927 = vpop.f32.mrb[0].mxu0
    %v1928 = vadd.f32 0.0, %v1927
    %v1929 = vpop.f32.mrb[0].mxu0
    %1930 = vdwg.mxu0
    %v1931 = vmul.f32 %v1858, %v826
    %v1932 = vsel %vm582, %v1931, 0.0
    %1933 = vadd.xlane.f32.xlu0 %v1932
    %v1934 = vpop.xlane.xlu0 %1933
    %v1935 = vlaneseq
    %v1936 = vshrl.u32 %v1935, 7
    %v1937 = vsub.s32 0, %v1936
    %v1938 = vrot.slane %v1928, %v1937
    %v1939 = vmul.f32 %v1721, %v1938
    %v1940 = vmul.f32 %v1722, %v1938
    %v1941 = vmul.f32 %v1723, %v1938
    %v1942 = vmul.f32 %v1724, %v1938
    %v1943 = vmul.f32 %v1725, %v1938
    %v1944 = vmul.f32 %v1726, %v1938
    %v1945 = vmul.f32 %v1727, %v1938
    %v1946 = vmul.f32 %v1728, %v1938
    %v1947 = vmul.f32 %v1729, %v1938
    %v1948 = vmul.f32 %v1730, %v1938
    %v1949 = vmul.f32 %v1731, %v1938
    %v1950 = vmul.f32 %v1732, %v1938
    %v1951 = vmul.f32 %v1733, %v1938
    %v1952 = vmul.f32 %v1734, %v1938
    %v1953 = vmul.f32 %v1735, %v1938
    %v1954 = vmul.f32 %v1736, %v1938
    %v1955 = vmul.f32 %v1737, %v1938
    %v1956 = vmul.f32 %v1738, %v1938
    %v1957 = vmul.f32 %v1739, %v1938
    %v1958 = vmul.f32 %v1740, %v1938
    %v1959 = vmul.f32 %v1741, %v1938
    %v1960 = vmul.f32 %v1742, %v1938
    %v1961 = vmul.f32 %v1743, %v1938
    %v1962 = vmul.f32 %v1744, %v1938
    %v1963 = vmul.f32 %v1745, %v1938
    %v1964 = vmul.f32 %v1746, %v1938
    %v1965 = vmul.f32 %v1747, %v1938
    %v1966 = vmul.f32 %v1748, %v1938
    %v1967 = vmul.f32 %v1749, %v1938
    %v1968 = vmul.f32 %v1750, %v1938
    %v1969 = vmul.f32 %v1751, %v1938
    %v1970 = vmul.f32 %v1752, %v1938
    %1971 = vadd.xlane.f32.xlu0 %v1939
    %v1972 = vpop.xlane.xlu0 %1971
    %1973 = vadd.xlane.f32.xlu0 %v1940
    %v1974 = vpop.xlane.xlu0 %1973
    %1975 = vadd.xlane.f32.xlu0 %v1941
    %v1976 = vpop.xlane.xlu0 %1975
    %1977 = vadd.xlane.f32.xlu0 %v1942
    %v1978 = vpop.xlane.xlu0 %1977
    %1979 = vadd.xlane.f32.xlu0 %v1943
    %v1980 = vpop.xlane.xlu0 %1979
    %1981 = vadd.xlane.f32.xlu0 %v1944
    %v1982 = vpop.xlane.xlu0 %1981
    %1983 = vadd.xlane.f32.xlu0 %v1945
    %v1984 = vpop.xlane.xlu0 %1983
    %1985 = vadd.xlane.f32.xlu0 %v1946
    %v1986 = vpop.xlane.xlu0 %1985
    %1987 = vadd.xlane.f32.xlu0 %v1947
    %v1988 = vpop.xlane.xlu0 %1987
    %1989 = vadd.xlane.f32.xlu0 %v1948
    %v1990 = vpop.xlane.xlu0 %1989
    %1991 = vadd.xlane.f32.xlu0 %v1949
    %v1992 = vpop.xlane.xlu0 %1991
    %1993 = vadd.xlane.f32.xlu0 %v1950
    %v1994 = vpop.xlane.xlu0 %1993
    %1995 = vadd.xlane.f32.xlu0 %v1951
    %v1996 = vpop.xlane.xlu0 %1995
    %1997 = vadd.xlane.f32.xlu0 %v1952
    %v1998 = vpop.xlane.xlu0 %1997
    %1999 = vadd.xlane.f32.xlu0 %v1953
    %v2000 = vpop.xlane.xlu0 %1999
    %2001 = vadd.xlane.f32.xlu0 %v1954
    %v2002 = vpop.xlane.xlu0 %2001
    %2003 = vadd.xlane.f32.xlu0 %v1955
    %v2004 = vpop.xlane.xlu0 %2003
    %2005 = vadd.xlane.f32.xlu0 %v1956
    %v2006 = vpop.xlane.xlu0 %2005
    %2007 = vadd.xlane.f32.xlu0 %v1957
    %v2008 = vpop.xlane.xlu0 %2007
    %2009 = vadd.xlane.f32.xlu0 %v1958
    %v2010 = vpop.xlane.xlu0 %2009
    %2011 = vadd.xlane.f32.xlu0 %v1959
    %v2012 = vpop.xlane.xlu0 %2011
    %2013 = vadd.xlane.f32.xlu0 %v1960
    %v2014 = vpop.xlane.xlu0 %2013
    %2015 = vadd.xlane.f32.xlu0 %v1961
    %v2016 = vpop.xlane.xlu0 %2015
    %2017 = vadd.xlane.f32.xlu0 %v1962
    %v2018 = vpop.xlane.xlu0 %2017
    %2019 = vadd.xlane.f32.xlu0 %v1963
    %v2020 = vpop.xlane.xlu0 %2019
    %2021 = vadd.xlane.f32.xlu0 %v1964
    %v2022 = vpop.xlane.xlu0 %2021
    %2023 = vadd.xlane.f32.xlu0 %v1965
    %v2024 = vpop.xlane.xlu0 %2023
    %2025 = vadd.xlane.f32.xlu0 %v1966
    %v2026 = vpop.xlane.xlu0 %2025
    %2027 = vadd.xlane.f32.xlu0 %v1967
    %v2028 = vpop.xlane.xlu0 %2027
    %2029 = vadd.xlane.f32.xlu0 %v1968
    %v2030 = vpop.xlane.xlu0 %2029
    %2031 = vadd.xlane.f32.xlu0 %v1969
    %v2032 = vpop.xlane.xlu0 %2031
    %2033 = vadd.xlane.f32.xlu0 %v1970
    %v2034 = vpop.xlane.xlu0 %2033
    %v2035 = vlaneseq
    %v2036 = vshrl.u32 %v2035, 7
    %v2037 = vsub.s32 0, %v2036
    %v2038 = vrot.slane %v1934, %v2037
    %v2039 = vadd.f32 %v1972, %v2038
    %v2040 = vadd.f32 %v1974, %v2038
    %v2041 = vadd.f32 %v1976, %v2038
    %v2042 = vadd.f32 %v1978, %v2038
    %v2043 = vadd.f32 %v1980, %v2038
    %v2044 = vadd.f32 %v1982, %v2038
    %v2045 = vadd.f32 %v1984, %v2038
    %v2046 = vadd.f32 %v1986, %v2038
    %v2047 = vadd.f32 %v1988, %v2038
    %v2048 = vadd.f32 %v1990, %v2038
    %v2049 = vadd.f32 %v1992, %v2038
    %v2050 = vadd.f32 %v1994, %v2038
    %v2051 = vadd.f32 %v1996, %v2038
    %v2052 = vadd.f32 %v1998, %v2038
    %v2053 = vadd.f32 %v2000, %v2038
    %v2054 = vadd.f32 %v2002, %v2038
    %v2055 = vadd.f32 %v2004, %v2038
    %v2056 = vadd.f32 %v2006, %v2038
    %v2057 = vadd.f32 %v2008, %v2038
    %v2058 = vadd.f32 %v2010, %v2038
    %v2059 = vadd.f32 %v2012, %v2038
    %v2060 = vadd.f32 %v2014, %v2038
    %v2061 = vadd.f32 %v2016, %v2038
    %v2062 = vadd.f32 %v2018, %v2038
    %v2063 = vadd.f32 %v2020, %v2038
    %v2064 = vadd.f32 %v2022, %v2038
    %v2065 = vadd.f32 %v2024, %v2038
    %v2066 = vadd.f32 %v2026, %v2038
    %v2067 = vadd.f32 %v2028, %v2038
    %v2068 = vadd.f32 %v2030, %v2038
    %v2069 = vadd.f32 %v2032, %v2038
    %v2070 = vadd.f32 %v2034, %v2038
    %v2071 = vxor.u32 %v2039, 2147483648
    %v2072 = vxor.u32 %v2040, 2147483648
    %v2073 = vxor.u32 %v2041, 2147483648
    %v2074 = vxor.u32 %v2042, 2147483648
    %v2075 = vxor.u32 %v2043, 2147483648
    %v2076 = vxor.u32 %v2044, 2147483648
    %v2077 = vxor.u32 %v2045, 2147483648
    %v2078 = vxor.u32 %v2046, 2147483648
    %v2079 = vxor.u32 %v2047, 2147483648
    %v2080 = vxor.u32 %v2048, 2147483648
    %v2081 = vxor.u32 %v2049, 2147483648
    %v2082 = vxor.u32 %v2050, 2147483648
    %v2083 = vxor.u32 %v2051, 2147483648
    %v2084 = vxor.u32 %v2052, 2147483648
    %v2085 = vxor.u32 %v2053, 2147483648
    %v2086 = vxor.u32 %v2054, 2147483648
    %v2087 = vxor.u32 %v2055, 2147483648
    %v2088 = vxor.u32 %v2056, 2147483648
    %v2089 = vxor.u32 %v2057, 2147483648
    %v2090 = vxor.u32 %v2058, 2147483648
    %v2091 = vxor.u32 %v2059, 2147483648
    %v2092 = vxor.u32 %v2060, 2147483648
    %v2093 = vxor.u32 %v2061, 2147483648
    %v2094 = vxor.u32 %v2062, 2147483648
    %v2095 = vxor.u32 %v2063, 2147483648
    %v2096 = vxor.u32 %v2064, 2147483648
    %v2097 = vxor.u32 %v2065, 2147483648
    %v2098 = vxor.u32 %v2066, 2147483648
    %v2099 = vxor.u32 %v2067, 2147483648
    %v2100 = vxor.u32 %v2068, 2147483648
    %v2101 = vxor.u32 %v2069, 2147483648
    %v2102 = vxor.u32 %v2070, 2147483648
    %v2103 = vmul.f32 %v2071, 1.442695
    %v2104 = vpow.pop %v2103
    %v2105 = vmul.f32 %v2072, 1.442695
    %v2106 = vpow.pop %v2105
    %v2107 = vmul.f32 %v2073, 1.442695
    %v2108 = vpow.pop %v2107
    %v2109 = vmul.f32 %v2074, 1.442695
    %v2110 = vpow.pop %v2109
    %v2111 = vmul.f32 %v2075, 1.442695
    %v2112 = vpow.pop %v2111
    %v2113 = vmul.f32 %v2076, 1.442695
    %v2114 = vpow.pop %v2113
    %v2115 = vmul.f32 %v2077, 1.442695
    %v2116 = vpow.pop %v2115
    %v2117 = vmul.f32 %v2078, 1.442695
    %v2118 = vpow.pop %v2117
    %v2119 = vmul.f32 %v2079, 1.442695
    %v2120 = vpow.pop %v2119
    %v2121 = vmul.f32 %v2080, 1.442695
    %v2122 = vpow.pop %v2121
    %v2123 = vmul.f32 %v2081, 1.442695
    %v2124 = vpow.pop %v2123
    %v2125 = vmul.f32 %v2082, 1.442695
    %v2126 = vpow.pop %v2125
    %v2127 = vmul.f32 %v2083, 1.442695
    %v2128 = vpow.pop %v2127
    %v2129 = vmul.f32 %v2084, 1.442695
    %v2130 = vpow.pop %v2129
    %v2131 = vmul.f32 %v2085, 1.442695
    %v2132 = vpow.pop %v2131
    %v2133 = vmul.f32 %v2086, 1.442695
    %v2134 = vpow.pop %v2133
    %v2135 = vmul.f32 %v2087, 1.442695
    %v2136 = vpow.pop %v2135
    %v2137 = vmul.f32 %v2088, 1.442695
    %v2138 = vpow.pop %v2137
    %v2139 = vmul.f32 %v2089, 1.442695
    %v2140 = vpow.pop %v2139
    %v2141 = vmul.f32 %v2090, 1.442695
    %v2142 = vpow.pop %v2141
    %v2143 = vmul.f32 %v2091, 1.442695
    %v2144 = vpow.pop %v2143
    %v2145 = vmul.f32 %v2092, 1.442695
    %v2146 = vpow.pop %v2145
    %v2147 = vmul.f32 %v2093, 1.442695
    %v2148 = vpow.pop %v2147
    %v2149 = vmul.f32 %v2094, 1.442695
    %v2150 = vpow.pop %v2149
    %v2151 = vmul.f32 %v2095, 1.442695
    %v2152 = vpow.pop %v2151
    %v2153 = vmul.f32 %v2096, 1.442695
    %v2154 = vpow.pop %v2153
    %v2155 = vmul.f32 %v2097, 1.442695
    %v2156 = vpow.pop %v2155
    %v2157 = vmul.f32 %v2098, 1.442695
    %v2158 = vpow.pop %v2157
    %v2159 = vmul.f32 %v2099, 1.442695
    %v2160 = vpow.pop %v2159
    %v2161 = vmul.f32 %v2100, 1.442695
    %v2162 = vpow.pop %v2161
    %v2163 = vmul.f32 %v2101, 1.442695
    %v2164 = vpow.pop %v2163
    %v2165 = vmul.f32 %v2102, 1.442695
    %v2166 = vpow.pop %v2165
    %v2167 = vadd.f32 %v2104, 1.0
    %v2168 = vadd.f32 %v2106, 1.0
    %v2169 = vadd.f32 %v2108, 1.0
    %v2170 = vadd.f32 %v2110, 1.0
    %v2171 = vadd.f32 %v2112, 1.0
    %v2172 = vadd.f32 %v2114, 1.0
    %v2173 = vadd.f32 %v2116, 1.0
    %v2174 = vadd.f32 %v2118, 1.0
    %v2175 = vadd.f32 %v2120, 1.0
    %v2176 = vadd.f32 %v2122, 1.0
    %v2177 = vadd.f32 %v2124, 1.0
    %v2178 = vadd.f32 %v2126, 1.0
    %v2179 = vadd.f32 %v2128, 1.0
    %v2180 = vadd.f32 %v2130, 1.0
    %v2181 = vadd.f32 %v2132, 1.0
    %v2182 = vadd.f32 %v2134, 1.0
    %v2183 = vadd.f32 %v2136, 1.0
    %v2184 = vadd.f32 %v2138, 1.0
    %v2185 = vadd.f32 %v2140, 1.0
    %v2186 = vadd.f32 %v2142, 1.0
    %v2187 = vadd.f32 %v2144, 1.0
    %v2188 = vadd.f32 %v2146, 1.0
    %v2189 = vadd.f32 %v2148, 1.0
    %v2190 = vadd.f32 %v2150, 1.0
    %v2191 = vadd.f32 %v2152, 1.0
    %v2192 = vadd.f32 %v2154, 1.0
    %v2193 = vadd.f32 %v2156, 1.0
    %v2194 = vadd.f32 %v2158, 1.0
    %v2195 = vadd.f32 %v2160, 1.0
    %v2196 = vadd.f32 %v2162, 1.0
    %v2197 = vadd.f32 %v2164, 1.0
    %v2198 = vadd.f32 %v2166, 1.0
    %v2199 = vrcp.pop %v2167
    %v2200 = vmul.f32 1.0, %v2199
    %v2201 = vrcp.pop %v2168
    %v2202 = vmul.f32 1.0, %v2201
    %v2203 = vrcp.pop %v2169
    %v2204 = vmul.f32 1.0, %v2203
    %v2205 = vrcp.pop %v2170
    %v2206 = vmul.f32 1.0, %v2205
    %v2207 = vrcp.pop %v2171
    %v2208 = vmul.f32 1.0, %v2207
    %v2209 = vrcp.pop %v2172
    %v2210 = vmul.f32 1.0, %v2209
    %v2211 = vrcp.pop %v2173
    %v2212 = vmul.f32 1.0, %v2211
    %v2213 = vrcp.pop %v2174
    %v2214 = vmul.f32 1.0, %v2213
    %v2215 = vrcp.pop %v2175
    %v2216 = vmul.f32 1.0, %v2215
    %v2217 = vrcp.pop %v2176
    %v2218 = vmul.f32 1.0, %v2217
    %v2219 = vrcp.pop %v2177
    %v2220 = vmul.f32 1.0, %v2219
    %v2221 = vrcp.pop %v2178
    %v2222 = vmul.f32 1.0, %v2221
    %v2223 = vrcp.pop %v2179
    %v2224 = vmul.f32 1.0, %v2223
    %v2225 = vrcp.pop %v2180
    %v2226 = vmul.f32 1.0, %v2225
    %v2227 = vrcp.pop %v2181
    %v2228 = vmul.f32 1.0, %v2227
    %v2229 = vrcp.pop %v2182
    %v2230 = vmul.f32 1.0, %v2229
    %v2231 = vrcp.pop %v2183
    %v2232 = vmul.f32 1.0, %v2231
    %v2233 = vrcp.pop %v2184
    %v2234 = vmul.f32 1.0, %v2233
    %v2235 = vrcp.pop %v2185
    %v2236 = vmul.f32 1.0, %v2235
    %v2237 = vrcp.pop %v2186
    %v2238 = vmul.f32 1.0, %v2237
    %v2239 = vrcp.pop %v2187
    %v2240 = vmul.f32 1.0, %v2239
    %v2241 = vrcp.pop %v2188
    %v2242 = vmul.f32 1.0, %v2241
    %v2243 = vrcp.pop %v2189
    %v2244 = vmul.f32 1.0, %v2243
    %v2245 = vrcp.pop %v2190
    %v2246 = vmul.f32 1.0, %v2245
    %v2247 = vrcp.pop %v2191
    %v2248 = vmul.f32 1.0, %v2247
    %v2249 = vrcp.pop %v2192
    %v2250 = vmul.f32 1.0, %v2249
    %v2251 = vrcp.pop %v2193
    %v2252 = vmul.f32 1.0, %v2251
    %v2253 = vrcp.pop %v2194
    %v2254 = vmul.f32 1.0, %v2253
    %v2255 = vrcp.pop %v2195
    %v2256 = vmul.f32 1.0, %v2255
    %v2257 = vrcp.pop %v2196
    %v2258 = vmul.f32 1.0, %v2257
    %v2259 = vrcp.pop %v2197
    %v2260 = vmul.f32 1.0, %v2259
    %v2261 = vrcp.pop %v2198
    %v2262 = vmul.f32 1.0, %v2261
    %v2263 = vadd.f32 %v2200, 1.0
    %v2264 = vadd.f32 %v2202, 1.0
    %v2265 = vadd.f32 %v2204, 1.0
    %v2266 = vadd.f32 %v2206, 1.0
    %v2267 = vadd.f32 %v2208, 1.0
    %v2268 = vadd.f32 %v2210, 1.0
    %v2269 = vadd.f32 %v2212, 1.0
    %v2270 = vadd.f32 %v2214, 1.0
    %v2271 = vadd.f32 %v2216, 1.0
    %v2272 = vadd.f32 %v2218, 1.0
    %v2273 = vadd.f32 %v2220, 1.0
    %v2274 = vadd.f32 %v2222, 1.0
    %v2275 = vadd.f32 %v2224, 1.0
    %v2276 = vadd.f32 %v2226, 1.0
    %v2277 = vadd.f32 %v2228, 1.0
    %v2278 = vadd.f32 %v2230, 1.0
    %v2279 = vadd.f32 %v2232, 1.0
    %v2280 = vadd.f32 %v2234, 1.0
    %v2281 = vadd.f32 %v2236, 1.0
    %v2282 = vadd.f32 %v2238, 1.0
    %v2283 = vadd.f32 %v2240, 1.0
    %v2284 = vadd.f32 %v2242, 1.0
    %v2285 = vadd.f32 %v2244, 1.0
    %v2286 = vadd.f32 %v2246, 1.0
    %v2287 = vadd.f32 %v2248, 1.0
    %v2288 = vadd.f32 %v2250, 1.0
    %v2289 = vadd.f32 %v2252, 1.0
    %v2290 = vadd.f32 %v2254, 1.0
    %v2291 = vadd.f32 %v2256, 1.0
    %v2292 = vadd.f32 %v2258, 1.0
    %v2293 = vadd.f32 %v2260, 1.0
    %v2294 = vadd.f32 %v2262, 1.0
    %v2295 = vmul.f32 %v1721, %v2263
    %v2296 = vmul.f32 %v1722, %v2264
    %v2297 = vmul.f32 %v1723, %v2265
    %v2298 = vmul.f32 %v1724, %v2266
    %v2299 = vmul.f32 %v1725, %v2267
    %v2300 = vmul.f32 %v1726, %v2268
    %v2301 = vmul.f32 %v1727, %v2269
    %v2302 = vmul.f32 %v1728, %v2270
    %v2303 = vmul.f32 %v1729, %v2271
    %v2304 = vmul.f32 %v1730, %v2272
    %v2305 = vmul.f32 %v1731, %v2273
    %v2306 = vmul.f32 %v1732, %v2274
    %v2307 = vmul.f32 %v1733, %v2275
    %v2308 = vmul.f32 %v1734, %v2276
    %v2309 = vmul.f32 %v1735, %v2277
    %v2310 = vmul.f32 %v1736, %v2278
    %v2311 = vmul.f32 %v1737, %v2279
    %v2312 = vmul.f32 %v1738, %v2280
    %v2313 = vmul.f32 %v1739, %v2281
    %v2314 = vmul.f32 %v1740, %v2282
    %v2315 = vmul.f32 %v1741, %v2283
    %v2316 = vmul.f32 %v1742, %v2284
    %v2317 = vmul.f32 %v1743, %v2285
    %v2318 = vmul.f32 %v1744, %v2286
    %v2319 = vmul.f32 %v1745, %v2287
    %v2320 = vmul.f32 %v1746, %v2288
    %v2321 = vmul.f32 %v1747, %v2289
    %v2322 = vmul.f32 %v1748, %v2290
    %v2323 = vmul.f32 %v1749, %v2291
    %v2324 = vmul.f32 %v1750, %v2292
    %v2325 = vmul.f32 %v1751, %v2293
    %v2326 = vmul.f32 %v1752, %v2294
    %s2327 = scalar_lea.vmem [#allocation11], 256
    %2328 = vst [vmem:[%s2327] sm:$0xff] %v2295
    %2329 = vst [vmem:[%s2327 + $0x8] sm:$0xff] %v2296
    %2330 = vst [vmem:[%s2327 + $0x10] sm:$0xff] %v2297
    %2331 = vst [vmem:[%s2327 + $0x18] sm:$0xff] %v2298
    %2332 = vst [vmem:[%s2327 + $0x20] sm:$0xff] %v2299
    %2333 = vst [vmem:[%s2327 + $0x28] sm:$0xff] %v2300
    %2334 = vst [vmem:[%s2327 + $0x30] sm:$0xff] %v2301
    %2335 = vst [vmem:[%s2327 + $0x38] sm:$0xff] %v2302
    %2336 = vst [vmem:[%s2327 + $0x40] sm:$0xff] %v2303
    %2337 = vst [vmem:[%s2327 + $0x48] sm:$0xff] %v2304
    %2338 = vst [vmem:[%s2327 + $0x50] sm:$0xff] %v2305
    %2339 = vst [vmem:[%s2327 + $0x58] sm:$0xff] %v2306
    %2340 = vst [vmem:[%s2327 + $0x60] sm:$0xff] %v2307
    %2341 = vst [vmem:[%s2327 + $0x68] sm:$0xff] %v2308
    %2342 = vst [vmem:[%s2327 + $0x70] sm:$0xff] %v2309
    %2343 = vst [vmem:[%s2327 + $0x78] sm:$0xff] %v2310
    %2344 = vst [vmem:[%s2327 + $0x80] sm:$0xff] %v2311
    %2345 = vst [vmem:[%s2327 + $0x88] sm:$0xff] %v2312
    %2346 = vst [vmem:[%s2327 + $0x90] sm:$0xff] %v2313
    %2347 = vst [vmem:[%s2327 + $0x98] sm:$0xff] %v2314
    %2348 = vst [vmem:[%s2327 + $0xa0] sm:$0xff] %v2315
    %2349 = vst [vmem:[%s2327 + $0xa8] sm:$0xff] %v2316
    %2350 = vst [vmem:[%s2327 + $0xb0] sm:$0xff] %v2317
    %2351 = vst [vmem:[%s2327 + $0xb8] sm:$0xff] %v2318
    %2352 = vst [vmem:[%s2327 + $0xc0] sm:$0xff] %v2319
    %2353 = vst [vmem:[%s2327 + $0xc8] sm:$0xff] %v2320
    %2354 = vst [vmem:[%s2327 + $0xd0] sm:$0xff] %v2321
    %2355 = vst [vmem:[%s2327 + $0xd8] sm:$0xff] %v2322
    %2356 = vst [vmem:[%s2327 + $0xe0] sm:$0xff] %v2323
    %2357 = vst [vmem:[%s2327 + $0xe8] sm:$0xff] %v2324
    %2358 = vst [vmem:[%s2327 + $0xf0] sm:$0xff] %v2325
    %2359 = vst [vmem:[%s2327 + $0xf8] sm:$0xff] %v2326
    // Predicated region
    $region42: #{psa_forward_nhwc.1} parent=1 // pred_check
      _
    $region43: #{psa_forward_nhwc.1} parent=1 // pred_check_branch
      %2361 = sbr.rel (0) target = $region45
    $region44: #{psa_forward_nhwc.1} parent=1 // pred_region
      %s2363 = ssub.s32 8192, 8192
      %2364 = vsyncadd [#allocation4], %s2363
      %s2365 = sshll.u32 [#allocation11], 4
      %s2366 = int_to_ptr.vmem [resolvable:$true] %s2365
      %2371 = dma.vmem_to_hbm [thread:$0]  %s2366, 8192, %s5, [#allocation4], 128, 128, 8
    $region45: #{psa_forward_nhwc.1} parent=1 // pred_fallthru
      _
    // Predicated region
    $region46: #{psa_forward_nhwc.1} parent=1 // pred_check
      _
    $region47: #{psa_forward_nhwc.1} parent=1 // pred_check_branch
      %2373 = sbr.rel (0) target = $region49
    $region48: #{psa_forward_nhwc.1} parent=1 // pred_region
      %2374 = dma.done [#allocation4], 8192
    $region49: #{psa_forward_nhwc.1} parent=1 // pred_fallthru
      _
    %2375 = vsyncpa [#allocation3], 1
    %2376 = vsyncpa [#allocation6], 1
    %2377 = vsyncpa [#allocation9], 1
    %2378 = vsyncpa [#allocation4], 1

</llo_original>
